<compile_context>
chip_gen: v7x
topology: tpu7x:2x2x1
jax: 0.10.0
libtpu: 0.0.40
codegen_flags: <defaults>
</compile_context>

<pallas_src>
import jax
import jax.numpy as jnp
from jax import lax
from jax.experimental import pallas as pl
from jax.experimental.pallas import tpu as pltpu


def _round_up(v, m):
    return (v + m - 1) // m * m


def _make_vlad_kernel(tn, n_valid, need_col_mask, agg_in_bf16):
    """Build the Vlad kernel closed over static tiling parameters."""

    def kernel(x_ref, c_ref, c2s_ref, sc2_ref, s_ref, e_ref, acc_ref, asum_ref):
        # x_ref   : (1, D, TN)  current batch element, current N tile (native layout)
        # c_ref   : (Kp, D)     codewords (zero-padded rows), resident
        # c2s_ref : (Kp, D)     2 * scale[k] * codewords[k,:], resident
        # sc2_ref : (Kp, 1)     scale[k]*||c_k||^2 (+ -1e30 on padded clusters)
        # s_ref   : (Kp, 1)     scale (zero-padded)
        # e_ref   : (1, Kp, D)  output block (same block across n -> resident)
        # acc_ref : (Kp, D)     VMEM accumulator for A @ X^T
        # asum_ref: (Kp, 1)     VMEM accumulator for sum_i A[k, i]
        n = pl.program_id(1)

        @pl.when(n == 0)
        def _():
            acc_ref[...] = jnp.zeros_like(acc_ref)
            asum_ref[...] = jnp.zeros_like(asum_ref)

        x = x_ref[0]                                   # (D, TN) f32

        if need_col_mask:
            col = n * tn + lax.broadcasted_iota(jnp.int32, (1, tn), 1)
            valid = col < n_valid                      # (1, TN)
            # zero out-of-range columns of the (implicitly padded) last block so
            # garbage data (possibly NaN/Inf) never reaches the MXU accumulators
            x = jnp.where(valid, x, 0.0)

        # scaled_l2 logits (K on sublanes, N on lanes):
        #   sl[k,i] = s[k]*||x_i||^2 - x_i . (2*s[k]*c_k) + s[k]*||c_k||^2 (+pad bias)
        x2 = jnp.sum(x * x, axis=0, keepdims=True)     # (1, TN)
        xc = lax.dot_general(
            c2s_ref[...], x,
            dimension_numbers=(((1,), (0,)), ((), ())),        # contract D (canonical)
            preferred_element_type=jnp.float32)                # (Kp, TN)
        sl = s_ref[...] * x2 - xc + sc2_ref[...]               # (Kp, TN)

        # softmax over clusters (sublane axis)
        m = jnp.max(sl, axis=0, keepdims=True)                 # (1, TN)
        p = jnp.exp(sl - m)
        denom = jnp.sum(p, axis=0, keepdims=True)              # (1, TN)
        r = pl.reciprocal(denom, approx=True)
        r = r * (2.0 - denom * r)        # one Newton step -> ~f32 accuracy
        a = p * r                                              # (Kp, TN)

        if need_col_mask:
            a = jnp.where(valid, a, 0.0)

        # aggregate: acc[k,d] += sum_i a[k,i] * x[d,i]   (contract the TN lane axis)
        if agg_in_bf16:
            acc_ref[...] += lax.dot_general(
                a.astype(jnp.bfloat16), x.astype(jnp.bfloat16),
                dimension_numbers=(((1,), (1,)), ((), ())),
                preferred_element_type=jnp.float32)            # (Kp, D)
        else:
            acc_ref[...] += lax.dot_general(
                a, x,
                dimension_numbers=(((1,), (1,)), ((), ())),
                preferred_element_type=jnp.float32)            # (Kp, D)
        asum_ref[...] += jnp.sum(a, axis=1, keepdims=True)     # (Kp, 1)

        @pl.when(n == pl.num_programs(1) - 1)
        def _():
            e = acc_ref[...] - asum_ref[...] * c_ref[...]      # (Kp, D)
            e_ref[0] = e.astype(e_ref.dtype)

    return kernel


def _select_tiling(N, D, Kp):
    """Generation-aware N-tile size + VMEM limit."""
    try:
        vmem_cap = int(pltpu.get_tpu_info().vmem_capacity_bytes)
    except Exception:
        vmem_cap = 64 << 20                       # conservative (v7x-sized) fallback
    big_vmem = vmem_cap >= (100 << 20)            # v5e / v6e: 128 MiB per core
    vmem_limit_cap = (96 << 20) if big_vmem else (48 << 20)
    target_tile_bytes = (8 << 20) if big_vmem else (6 << 20)

    # Per-unit-of-tn VMEM cost: double-buffered X tile + ~5 live (Kp, tn) f32 temps
    per_tn = 2 * D * 4 + 5 * Kp * 4
    resident = (4 * Kp * D + 16 * Kp) * 4         # c, c2s, acc, out block, small vectors
    budget = int(0.70 * vmem_limit_cap) - resident
    tn_vmem = max(budget // per_tn, 128)

    tn_dma = max(target_tile_bytes // (D * 4), 512)   # amortize ~0.35us grid-step cost

    tn_cap = max(min(tn_vmem, tn_dma), 128)
    if N <= tn_cap:
        tn, n_tiles, need_mask = N, 1, False      # single exact tile (block dim == N)
    else:
        tn = max((tn_cap // 128) * 128, 128)      # lane-dense multiple of 128
        n_tiles = -(-N // tn)
        need_mask = (N % tn) != 0                 # ragged last tile handled in-kernel

    vmem_need = (2 * D * tn * 4                   # double-buffered X tile
                 + 5 * Kp * tn * 4                # sl/p/a temporaries headroom
                 + 6 * Kp * D * 4                 # c, c2s, acc, out block
                 + 32 * Kp * 4)                   # small (Kp,1) vectors (+ padding)
    vmem_limit = int(min(max(2 * vmem_need, 32 << 20), vmem_limit_cap))
    return tn, n_tiles, need_mask, vmem_limit


def vlad_forward(x, codewords, scale, *, agg_in_bf16=False):
    """x: (B, D, H, W) or (B, D, N); codewords: (K, D); scale: (K,). Returns (B, K, D) f32."""
    B, D = x.shape[0], x.shape[1]
    K = codewords.shape[0]
    assert codewords.shape == (K, D)

    # ---- native layout: (B, D, N). reshape is free (contiguous), no transpose/pad. ----
    if x.ndim == 4:
        x_bdn = x.reshape(B, D, -1)
    elif x.ndim == 3:
        x_bdn = x
    else:
        raise RuntimeError("Vlad Layer unknown input dims!")
    x_bdn = x_bdn.astype(jnp.float32)
    N = x_bdn.shape[2]

    # ---- lane-dense cluster padding (multiple of 128); D stays native ----
    Kp = max(_round_up(K, 128), 128)

    cw = jnp.zeros((Kp, D), jnp.float32).at[:K, :].set(codewords.astype(jnp.float32))
    sc = jnp.zeros((Kp,), jnp.float32).at[:K].set(scale.astype(jnp.float32))

    c2s = 2.0 * sc[:, None] * cw                        # (Kp, D)   folded 2*scale
    sc2 = sc * jnp.sum(cw * cw, axis=1)                 # (Kp,)     scale * ||c||^2
    # bake the padded-cluster mask into the bias: padded clusters take no softmax mass
    sc2 = jnp.where(jnp.arange(Kp) < K, sc2, jnp.float32(-1e30)).reshape(Kp, 1)
    s_col = sc.reshape(Kp, 1)

    tn, n_tiles, need_mask, vmem_limit = _select_tiling(N, D, Kp)
    kernel = _make_vlad_kernel(tn, N, need_mask, agg_in_bf16)

    out = pl.pallas_call(
        kernel,
        out_shape=jax.ShapeDtypeStruct((B, Kp, D), jnp.float32),
        grid_spec=pltpu.PrefetchScalarGridSpec(
            num_scalar_prefetch=0,
            grid=(B, n_tiles),
            in_specs=[
                pl.BlockSpec((1, D, tn), lambda b, n: (b, 0, n)),   # X tile (native layout)
                pl.BlockSpec((Kp, D), lambda b, n: (0, 0)),         # codewords
                pl.BlockSpec((Kp, D), lambda b, n: (0, 0)),         # 2*scale*codewords
                pl.BlockSpec((Kp, 1), lambda b, n: (0, 0)),         # scale*||c||^2 (+mask)
                pl.BlockSpec((Kp, 1), lambda b, n: (0, 0)),         # scale
            ],
            out_specs=pl.BlockSpec((1, Kp, D), lambda b, n: (b, 0, 0)),
            scratch_shapes=[
                pltpu.VMEM((Kp, D), jnp.float32),    # E accumulator (A @ X^T)
                pltpu.VMEM((Kp, 1), jnp.float32),    # sum_i A[k, i]
            ],
        ),
        compiler_params=pltpu.CompilerParams(
            dimension_semantics=("parallel", "arbitrary"),
            vmem_limit_bytes=vmem_limit,
        ),
    )(x_bdn, cw, c2s, sc2, s_col)

    return out[:, :K, :]


def _vlad_reference(x, codewords, scale):
    """Pure-JAX reference mirroring the PyTorch semantics."""
    B, D = x.shape[0], x.shape[1]
    x_bnd = jnp.transpose(x.reshape(B, D, -1), (0, 2, 1))       # (B, N, D)
    diff = x_bnd[:, :, None, :] - codewords[None, None, :, :]   # (B, N, K, D)
    sl = scale[None, None, :] * jnp.sum(diff * diff, axis=-1)   # (B, N, K)
    a = jax.nn.softmax(sl, axis=2)                              # (B, N, K)
    return jnp.einsum("bnk,bnkd->bkd", a, diff)                 # (B, K, D)


if __name__ == "__main__":
    # Small, deterministic setup consistent with the module's forward.
    B, D, K, H, W = 2, 32, 8, 8, 8

    key = jax.random.PRNGKey(0)
    kx, kc, ks = jax.random.split(key, 3)

    # Deterministic parameter init matching reset_params() distributions.
    std1 = 1.0 / (K * D) ** 0.5
    codewords = jax.random.uniform(kc, (K, D), jnp.float32, minval=-std1, maxval=std1)
    scale = jax.random.uniform(ks, (K,), jnp.float32, minval=-1.0, maxval=0.0)

    x = jax.random.normal(kx, (B, D, H, W), jnp.float32)

    vlad = jax.jit(vlad_forward)
    e_kernel = jax.block_until_ready(vlad(x, codewords, scale))
    e_ref = jax.block_until_ready(_vlad_reference(x, codewords, scale))

    assert e_kernel.shape == (B, K, D)
    assert jnp.allclose(e_kernel, e_ref, atol=1e-4, rtol=1e-4), float(
        jnp.max(jnp.abs(e_kernel - e_ref)))

    print("KERNEL_OK")
</pallas_src>

<mosaic_0001>
module attributes {stable_mosaic.version = 11 : i64} {
  func.func @kernel(%arg0: i32, %arg1: i32, %arg2: memref<1x32x64xf32, #tpu.memory_space<vmem>>, %arg3: memref<128x32xf32, #tpu.memory_space<vmem>>, %arg4: memref<128x32xf32, #tpu.memory_space<vmem>>, %arg5: memref<128x1xf32, #tpu.memory_space<vmem>>, %arg6: memref<128x1xf32, #tpu.memory_space<vmem>>, %arg7: memref<1x128x32xf32, #tpu.memory_space<vmem>>, %arg8: memref<128x32xf32, #tpu.memory_space<vmem>>, %arg9: memref<128x1xf32, #tpu.memory_space<vmem>>) attributes {dimension_semantics = [#tpu.dimension_semantics<parallel>, #tpu.dimension_semantics<arbitrary>], iteration_bounds = array<i64: 2, 1>, scalar_prefetch = 0 : i64, scratch_operands = 2 : i64, tpu.core_type = #tpu.core_type<tc>, window_params = [{transform_indices = @transform_0, window_bounds = array<i64: 1, 32, 64>}, {pipeline_mode = #tpu.pipeline_mode<synchronous>, transform_indices = @transform_1, window_bounds = array<i64: 128, 32>}, {pipeline_mode = #tpu.pipeline_mode<synchronous>, transform_indices = @transform_2, window_bounds = array<i64: 128, 32>}, {pipeline_mode = #tpu.pipeline_mode<synchronous>, transform_indices = @transform_3, window_bounds = array<i64: 128, 1>}, {pipeline_mode = #tpu.pipeline_mode<synchronous>, transform_indices = @transform_4, window_bounds = array<i64: 128, 1>}, {transform_indices = @transform_5, window_bounds = array<i64: 1, 128, 32>}]} {
    %c0_i32 = arith.constant 0 : i32
    %0 = arith.cmpi eq, %arg1, %c0_i32 : i32
    %1 = arith.extui %0 : i1 to i32
    %c0_i32_0 = arith.constant 0 : i32
    %2 = arith.cmpi ne, %1, %c0_i32_0 : i32
    scf.if %2 {
      %cst_25 = arith.constant 0.000000e+00 : f32
      %44 = vector.broadcast %cst_25 : f32 to vector<128x32xf32>
      %c0_26 = arith.constant 0 : index
      %c0_27 = arith.constant 0 : index
      %45 = vector.load %arg8[%c0_26, %c0_27] : memref<128x32xf32, #tpu.memory_space<vmem>>, vector<128x32xf32>
      tpu.vector_store %arg8[%c0_26, %c0_27], %44 {strides = array<i32>} : memref<128x32xf32, #tpu.memory_space<vmem>>, vector<128x32xf32>,
      %cst_28 = arith.constant 0.000000e+00 : f32
      %46 = vector.broadcast %cst_28 : f32 to vector<128x1xf32>
      %c0_29 = arith.constant 0 : index
      %c0_30 = arith.constant 0 : index
      %47 = vector.load %arg9[%c0_29, %c0_30] : memref<128x1xf32, #tpu.memory_space<vmem>>, vector<128x1xf32>
      tpu.vector_store %arg9[%c0_29, %c0_30], %46 {strides = array<i32>} : memref<128x1xf32, #tpu.memory_space<vmem>>, vector<128x1xf32>,
    } else {
    }
    %c0 = arith.constant 0 : index
    %c0_1 = arith.constant 0 : index
    %c0_2 = arith.constant 0 : index
    %3 = vector.load %arg2[%c0, %c0_1, %c0_2] : memref<1x32x64xf32, #tpu.memory_space<vmem>>, vector<1x32x64xf32>
    %4 = vector.shape_cast %3 : vector<1x32x64xf32> to vector<32x64xf32>
    %5 = arith.mulf %4, %4 : vector<32x64xf32>
    %cst = arith.constant dense<0.000000e+00> : vector<64xf32>
    %6 = vector.multi_reduction <add>, %5, %cst [0] : vector<32x64xf32> to vector<64xf32>
    %7 = vector.shape_cast %6 : vector<64xf32> to vector<1x64xf32>
    %c0_3 = arith.constant 0 : index
    %c0_4 = arith.constant 0 : index
    %8 = vector.load %arg4[%c0_3, %c0_4] : memref<128x32xf32, #tpu.memory_space<vmem>>, vector<128x32xf32>
    %cst_5 = arith.constant dense<0.000000e+00> : vector<128x64xf32>
    %9 = tpu.matmul %8, %4, %cst_5 {dimension_numbers = #tpu.dot_dimension_numbers<[1], [0], [0], [1], [0, 0, 1, 1], [], []>} : vector<128x32xf32>, vector<32x64xf32>, vector<128x64xf32> -> vector<128x64xf32>
    %c0_6 = arith.constant 0 : index
    %c0_7 = arith.constant 0 : index
    %10 = vector.load %arg6[%c0_6, %c0_7] : memref<128x1xf32, #tpu.memory_space<vmem>>, vector<128x1xf32>
    %11 = vector.broadcast %10 : vector<128x1xf32> to vector<128x64xf32>
    %12 = vector.broadcast %7 : vector<1x64xf32> to vector<128x64xf32>
    %13 = arith.mulf %11, %12 : vector<128x64xf32>
    %14 = arith.subf %13, %9 : vector<128x64xf32>
    %c0_8 = arith.constant 0 : index
    %c0_9 = arith.constant 0 : index
    %15 = vector.load %arg5[%c0_8, %c0_9] : memref<128x1xf32, #tpu.memory_space<vmem>>, vector<128x1xf32>
    %16 = vector.broadcast %15 : vector<128x1xf32> to vector<128x64xf32>
    %17 = arith.addf %14, %16 : vector<128x64xf32>
    %cst_10 = arith.constant dense<0xFF800000> : vector<64xf32>
    %18 = vector.multi_reduction <maximumf>, %17, %cst_10 [0] : vector<128x64xf32> to vector<64xf32>
    %19 = vector.shape_cast %18 : vector<64xf32> to vector<1x64xf32>
    %20 = vector.broadcast %19 : vector<1x64xf32> to vector<128x64xf32>
    %21 = arith.subf %17, %20 : vector<128x64xf32>
    %22 = math.exp %21 : vector<128x64xf32>
    %cst_11 = arith.constant dense<0.000000e+00> : vector<64xf32>
    %23 = vector.multi_reduction <add>, %22, %cst_11 [0] : vector<128x64xf32> to vector<64xf32>
    %24 = vector.shape_cast %23 : vector<64xf32> to vector<1x64xf32>
    %25 = tpu.reciprocal %24 {approx = true} : vector<1x64xf32> -> vector<1x64xf32>
    %26 = arith.mulf %24, %25 : vector<1x64xf32>
    %cst_12 = arith.constant 2.000000e+00 : f32
    %27 = vector.broadcast %cst_12 : f32 to vector<1x64xf32>
    %28 = arith.subf %27, %26 : vector<1x64xf32>
    %29 = arith.mulf %25, %28 : vector<1x64xf32>
    %30 = vector.broadcast %29 : vector<1x64xf32> to vector<128x64xf32>
    %31 = arith.mulf %22, %30 : vector<128x64xf32>
    %c0_13 = arith.constant 0 : index
    %c0_14 = arith.constant 0 : index
    %32 = vector.load %arg8[%c0_13, %c0_14] : memref<128x32xf32, #tpu.memory_space<vmem>>, vector<128x32xf32>
    %cst_15 = arith.constant dense<0.000000e+00> : vector<128x32xf32>
    %33 = tpu.matmul %31, %4, %cst_15 {dimension_numbers = #tpu.dot_dimension_numbers<[1], [1], [0], [0], [0, 0, 1, 0], [], []>} : vector<128x64xf32>, vector<32x64xf32>, vector<128x32xf32> -> vector<128x32xf32>
    %34 = arith.addf %32, %33 : vector<128x32xf32>
    %c0_16 = arith.constant 0 : index
    %c0_17 = arith.constant 0 : index
    %35 = vector.load %arg8[%c0_16, %c0_17] : memref<128x32xf32, #tpu.memory_space<vmem>>, vector<128x32xf32>
    tpu.vector_store %arg8[%c0_16, %c0_17], %34 {strides = array<i32>} : memref<128x32xf32, #tpu.memory_space<vmem>>, vector<128x32xf32>,
    %c0_18 = arith.constant 0 : index
    %c0_19 = arith.constant 0 : index
    %36 = vector.load %arg9[%c0_18, %c0_19] : memref<128x1xf32, #tpu.memory_space<vmem>>, vector<128x1xf32>
    %cst_20 = arith.constant dense<0.000000e+00> : vector<128xf32>
    %37 = vector.multi_reduction <add>, %31, %cst_20 [1] : vector<128x64xf32> to vector<128xf32>
    %38 = vector.shape_cast %37 : vector<128xf32> to vector<128x1xf32>
    %39 = arith.addf %36, %38 : vector<128x1xf32>
    %c0_21 = arith.constant 0 : index
    %c0_22 = arith.constant 0 : index
    %40 = vector.load %arg9[%c0_21, %c0_22] : memref<128x1xf32, #tpu.memory_space<vmem>>, vector<128x1xf32>
    tpu.vector_store %arg9[%c0_21, %c0_22], %39 {strides = array<i32>} : memref<128x1xf32, #tpu.memory_space<vmem>>, vector<128x1xf32>,
    %c0_i32_23 = arith.constant 0 : i32
    %41 = arith.cmpi eq, %arg1, %c0_i32_23 : i32
    %42 = arith.extui %41 : i1 to i32
    %c0_i32_24 = arith.constant 0 : i32
    %43 = arith.cmpi ne, %42, %c0_i32_24 : i32
    scf.if %43 {
      %c0_25 = arith.constant 0 : index
      %c0_26 = arith.constant 0 : index
      %44 = vector.load %arg8[%c0_25, %c0_26] : memref<128x32xf32, #tpu.memory_space<vmem>>, vector<128x32xf32>
      %c0_27 = arith.constant 0 : index
      %c0_28 = arith.constant 0 : index
      %45 = vector.load %arg9[%c0_27, %c0_28] : memref<128x1xf32, #tpu.memory_space<vmem>>, vector<128x1xf32>
      %c0_29 = arith.constant 0 : index
      %c0_30 = arith.constant 0 : index
      %46 = vector.load %arg3[%c0_29, %c0_30] : memref<128x32xf32, #tpu.memory_space<vmem>>, vector<128x32xf32>
      %47 = vector.broadcast %45 : vector<128x1xf32> to vector<128x32xf32>
      %48 = arith.mulf %47, %46 : vector<128x32xf32>
      %49 = arith.subf %44, %48 : vector<128x32xf32>
      %c0_31 = arith.constant 0 : index
      %c0_32 = arith.constant 0 : index
      %c0_33 = arith.constant 0 : index
      %50 = vector.load %arg7[%c0_31, %c0_32, %c0_33] : memref<1x128x32xf32, #tpu.memory_space<vmem>>, vector<1x128x32xf32>
      %51 = vector.shape_cast %50 : vector<1x128x32xf32> to vector<128x32xf32>
      %52 = vector.shape_cast %49 : vector<128x32xf32> to vector<1x128x32xf32>
      tpu.vector_store %arg7[%c0_31, %c0_32, %c0_33], %52 {strides = array<i32>} : memref<1x128x32xf32, #tpu.memory_space<vmem>>, vector<1x128x32xf32>,
    } else {
    }
    return
  }
  func.func @transform_0(%arg0: i32, %arg1: i32) -> (i32, i32, i32) {
    %c0_i32 = arith.constant 0 : i32
    %c0_i32_0 = arith.constant 0 : i32
    return %arg0, %c0_i32, %arg1 : i32, i32, i32
  }
  func.func @transform_1(%arg0: i32, %arg1: i32) -> (i32, i32) {
    %c0_i32 = arith.constant 0 : i32
    %c0_i32_0 = arith.constant 0 : i32
    %c0_i32_1 = arith.constant 0 : i32
    return %c0_i32, %c0_i32_0 : i32, i32
  }
  func.func @transform_2(%arg0: i32, %arg1: i32) -> (i32, i32) {
    %c0_i32 = arith.constant 0 : i32
    %c0_i32_0 = arith.constant 0 : i32
    %c0_i32_1 = arith.constant 0 : i32
    return %c0_i32, %c0_i32_0 : i32, i32
  }
  func.func @transform_3(%arg0: i32, %arg1: i32) -> (i32, i32) {
    %c0_i32 = arith.constant 0 : i32
    %c0_i32_0 = arith.constant 0 : i32
    %c0_i32_1 = arith.constant 0 : i32
    return %c0_i32, %c0_i32_0 : i32, i32
  }
  func.func @transform_4(%arg0: i32, %arg1: i32) -> (i32, i32) {
    %c0_i32 = arith.constant 0 : i32
    %c0_i32_0 = arith.constant 0 : i32
    %c0_i32_1 = arith.constant 0 : i32
    return %c0_i32, %c0_i32_0 : i32, i32
  }
  func.func @transform_5(%arg0: i32, %arg1: i32) -> (i32, i32, i32) {
    %c0_i32 = arith.constant 0 : i32
    %c0_i32_0 = arith.constant 0 : i32
    %c0_i32_1 = arith.constant 0 : i32
    return %arg0, %c0_i32, %c0_i32_0 : i32, i32, i32
  }
}

</mosaic_0001>

<llo_original>
// kernel: vlad_forward.1
$region0: #{vlad_forward.1}
  #allocation0 [shape = 'u32[]', space=smem, size = 0x4, offset = 0x4, fixed_abs, tag = 'smem constant byte address 0x4 - core index']
  #allocation1 [shape = 'u32[144,128]{1,0:T(1,128)}', space=vmem, size = 0x12000, scoped, tag = 'internal scratch']
  #allocation2 [shape = 'f32[128,32]{1,0:T(8,128)}', space=vmem, size = 0x10000, scoped, tag = 'scratch operand']
  #allocation3 [shape = 'f32[128,1]{1,0:T(8,128)}', space=vmem, size = 0x10000, scoped, tag = 'scratch operand']
  %s0 = inlined_call_operand.vmem [shape: f32[2,32,64], index: 0, kind: input, shape index: {}]
  %s1 = inlined_call_operand.vmem [shape: f32[128,32], index: 1, kind: input, shape index: {}]
  %s2 = inlined_call_operand.vmem [shape: f32[128,32], index: 2, kind: input, shape index: {}]
  %s3 = inlined_call_operand.vmem [shape: f32[128,1], index: 3, kind: input, shape index: {}]
  %s4 = inlined_call_operand.vmem [shape: f32[128,1], index: 4, kind: input, shape index: {}]
  %s5 = inlined_call_operand.vmem [shape: f32[2,128,32], index: 5, kind: output, shape index: {}]
  %s6 = sld [smem:[#allocation0]]
  $region61: #{vlad_forward.1} parent=0
    _
  %s8 = ssub.s32 1, %s6
  %s9 = scalar_select 0, %s8, %s6
  loop: start=0, step=1, limit=4
  $region2: #{vlad_forward.1} parent=0 // loop_pre_header
    _
  $region3: #{vlad_forward.1} parent=0 // loop_header
    %s11 = sphi 0, %s15
    %p12 = scmp.ge.s32.totalorder %s11, 4
    %s18 = sphi 0, %s30
    %s19 = sphi 0, %s26
    %s20 = sphi 0, %s18
    %s21 = sphi 0, %s19
    %s22 = sphi 0, %s20
    %s23 = sphi 0, %s21
    %s35 = sphi 0, %s37
    %s38 = sphi 0, %s35
    %s39 = sphi 0, %s38
    %s55 = sphi 0, %s39
    %s59 = sphi 0, %s59
    %s61 = sphi 0, %s59
    %s62 = sphi 0, %s61
    %s76 = sphi 0, %s62
    %s80 = sphi 0, %s80
    %s82 = sphi 0, %s80
    %s83 = sphi 0, %s82
    %s97 = sphi 0, %s83
    %s101 = sphi 0, %s101
    %s103 = sphi 0, %s101
    %s104 = sphi 0, %s103
    %s118 = sphi 0, %s104
    %s122 = sphi 0, %s122
    %s124 = sphi 0, %s122
    %s125 = sphi 0, %s124
    %s139 = sphi 0, %s125
    %s145 = sphi 0, %s147
    %s148 = sphi 0, %s145
    %s149 = sphi 0, %s148
    %s165 = sphi 0, %s149
  $region4: #{vlad_forward.1} parent=0 // loop_header_branch
    %14 = sbr.rel (%p12) target = $region8
  $region5: #{vlad_forward.1} parent=0 // loop_body
    %s16 = ssub.s32 %s11, 1
    %s17 = ssub.s32 %s11, 2
    %s24 = sadd.s32 1, %s19
    %p25 = scmp.ge.s32.totalorder %s24, 1
    %s26 = scalar_select %p25, 0, %s24
    %s27 = sadd.s32 1, %s18
    %s28 = scalar_select %p25, %s27, %s18
    %p29 = scmp.ge.s32.totalorder %s28, 2
    %s30 = scalar_select %p29, 0, %s28
    %s31 = ssub.s32 %s18, %s30
    %s32 = ssub.s32 %s19, %s26
    %s33 = sor.u32 %s31, %s32
    %p34 = scmp.eq.s32.totalorder %s33, 0
    %s36 = sadd.s32 %s35, 1
    %s37 = scalar_select %p34, %s35, %s36
    %p40 = pneg %p34
    %p41 = scmp.eq.s32.totalorder %s11, 1
    %p42 = por %p40, %p41
    %p43 = scmp.ne.s32.totalorder %s35, %s38
    %p44 = scmp.eq.s32.totalorder %s11, 0
    %p45 = por %p43, %p44
    %p46 = scmp.ne.s32.totalorder %s35, %s38
    %p47 = scmp.eq.s32.totalorder %s16, 1
    %p48 = por %p46, %p47
    %p49 = scmp.ne.s32.totalorder %s38, %s39
    %p50 = scmp.eq.s32.totalorder %s16, 0
    %p51 = por %p49, %p50
    %p52 = scmp.ne.s32.totalorder %s38, %s39
    %p53 = scmp.eq.s32.totalorder %s17, 1
    %p54 = por %p52, %p53
    %p56 = scmp.ne.s32.totalorder %s39, %s55
    %p57 = scmp.eq.s32.totalorder %s17, 0
    %p58 = por %p56, %p57
    %s60 = sadd.s32 %s59, 1
    %p63 = scmp.eq.s32.totalorder %s11, 1
    %p64 = scmp.ne.s32.totalorder %s59, %s61
    %p65 = scmp.eq.s32.totalorder %s11, 0
    %p66 = por %p64, %p65
    %p67 = scmp.ne.s32.totalorder %s59, %s61
    %p68 = scmp.eq.s32.totalorder %s16, 1
    %p69 = por %p67, %p68
    %p70 = scmp.ne.s32.totalorder %s61, %s62
    %p71 = scmp.eq.s32.totalorder %s16, 0
    %p72 = por %p70, %p71
    %p73 = scmp.ne.s32.totalorder %s61, %s62
    %p74 = scmp.eq.s32.totalorder %s17, 1
    %p75 = por %p73, %p74
    %p77 = scmp.ne.s32.totalorder %s62, %s76
    %p78 = scmp.eq.s32.totalorder %s17, 0
    %p79 = por %p77, %p78
    %s81 = sadd.s32 %s80, 1
    %p84 = scmp.eq.s32.totalorder %s11, 1
    %p85 = scmp.ne.s32.totalorder %s80, %s82
    %p86 = scmp.eq.s32.totalorder %s11, 0
    %p87 = por %p85, %p86
    %p88 = scmp.ne.s32.totalorder %s80, %s82
    %p89 = scmp.eq.s32.totalorder %s16, 1
    %p90 = por %p88, %p89
    %p91 = scmp.ne.s32.totalorder %s82, %s83
    %p92 = scmp.eq.s32.totalorder %s16, 0
    %p93 = por %p91, %p92
    %p94 = scmp.ne.s32.totalorder %s82, %s83
    %p95 = scmp.eq.s32.totalorder %s17, 1
    %p96 = por %p94, %p95
    %p98 = scmp.ne.s32.totalorder %s83, %s97
    %p99 = scmp.eq.s32.totalorder %s17, 0
    %p100 = por %p98, %p99
    %s102 = sadd.s32 %s101, 1
    %p105 = scmp.eq.s32.totalorder %s11, 1
    %p106 = scmp.ne.s32.totalorder %s101, %s103
    %p107 = scmp.eq.s32.totalorder %s11, 0
    %p108 = por %p106, %p107
    %p109 = scmp.ne.s32.totalorder %s101, %s103
    %p110 = scmp.eq.s32.totalorder %s16, 1
    %p111 = por %p109, %p110
    %p112 = scmp.ne.s32.totalorder %s103, %s104
    %p113 = scmp.eq.s32.totalorder %s16, 0
    %p114 = por %p112, %p113
    %p115 = scmp.ne.s32.totalorder %s103, %s104
    %p116 = scmp.eq.s32.totalorder %s17, 1
    %p117 = por %p115, %p116
    %p119 = scmp.ne.s32.totalorder %s104, %s118
    %p120 = scmp.eq.s32.totalorder %s17, 0
    %p121 = por %p119, %p120
    %s123 = sadd.s32 %s122, 1
    %p126 = scmp.eq.s32.totalorder %s11, 1
    %p127 = scmp.ne.s32.totalorder %s122, %s124
    %p128 = scmp.eq.s32.totalorder %s11, 0
    %p129 = por %p127, %p128
    %p130 = scmp.ne.s32.totalorder %s122, %s124
    %p131 = scmp.eq.s32.totalorder %s16, 1
    %p132 = por %p130, %p131
    %p133 = scmp.ne.s32.totalorder %s124, %s125
    %p134 = scmp.eq.s32.totalorder %s16, 0
    %p135 = por %p133, %p134
    %p136 = scmp.ne.s32.totalorder %s124, %s125
    %p137 = scmp.eq.s32.totalorder %s17, 1
    %p138 = por %p136, %p137
    %p140 = scmp.ne.s32.totalorder %s125, %s139
    %p141 = scmp.eq.s32.totalorder %s17, 0
    %p142 = por %p140, %p141
    %s143 = ssub.s32 %s18, %s30
    %p144 = scmp.eq.s32.totalorder %s143, 0
    %s146 = sadd.s32 %s145, 1
    %s147 = scalar_select %p144, %s145, %s146
    %p150 = pneg %p144
    %p151 = scmp.eq.s32.totalorder %s11, 1
    %p152 = por %p150, %p151
    %p153 = scmp.ne.s32.totalorder %s145, %s148
    %p154 = scmp.eq.s32.totalorder %s11, 0
    %p155 = por %p153, %p154
    %p156 = scmp.ne.s32.totalorder %s145, %s148
    %p157 = scmp.eq.s32.totalorder %s16, 1
    %p158 = por %p156, %p157
    %p159 = scmp.ne.s32.totalorder %s148, %s149
    %p160 = scmp.eq.s32.totalorder %s16, 0
    %p161 = por %p159, %p160
    %p162 = scmp.ne.s32.totalorder %s148, %s149
    %p163 = scmp.eq.s32.totalorder %s17, 1
    %p164 = por %p162, %p163
    %p166 = scmp.ne.s32.totalorder %s149, %s165
    %p167 = scmp.eq.s32.totalorder %s17, 0
    %p168 = por %p166, %p167
    %p169 = scmp.le.s32.totalorder 1, %s11
    %p170 = scmp.lt.s32.totalorder %s11, 3
    %p171 = pnand %p169, %p170
    %p172 = pneg %p171
    // Predicated region
    $region9: #{vlad_forward.1} parent=5 // pred_check
      _
    $region10: #{vlad_forward.1} parent=5 // pred_check_branch
      %174 = sbr.rel (%p171) target = $region12
    $region11: #{vlad_forward.1} parent=5 // pred_region
      %s175 = ssub.s32 %s11, 1
      // Predicated region
      $region13: #{vlad_forward.1} parent=11 // pred_check
        %p176 = pneg %p72
      $region14: #{vlad_forward.1} parent=11 // pred_check_branch
        %178 = sbr.rel (%p176) target = $region16
      $region15: #{vlad_forward.1} parent=11 // pred_region
        _
      $region16: #{vlad_forward.1} parent=11 // pred_fallthru
        _
      // Predicated region
      $region17: #{vlad_forward.1} parent=11 // pred_check
        %p179 = pneg %p93
      $region18: #{vlad_forward.1} parent=11 // pred_check_branch
        %181 = sbr.rel (%p179) target = $region20
      $region19: #{vlad_forward.1} parent=11 // pred_region
        _
      $region20: #{vlad_forward.1} parent=11 // pred_fallthru
        _
      // Predicated region
      $region21: #{vlad_forward.1} parent=11 // pred_check
        %p182 = pneg %p114
      $region22: #{vlad_forward.1} parent=11 // pred_check_branch
        %184 = sbr.rel (%p182) target = $region24
      $region23: #{vlad_forward.1} parent=11 // pred_region
        _
      $region24: #{vlad_forward.1} parent=11 // pred_fallthru
        _
      // Predicated region
      $region25: #{vlad_forward.1} parent=11 // pred_check
        %p185 = pneg %p135
      $region26: #{vlad_forward.1} parent=11 // pred_check_branch
        %187 = sbr.rel (%p185) target = $region28
      $region27: #{vlad_forward.1} parent=11 // pred_region
        _
      $region28: #{vlad_forward.1} parent=11 // pred_fallthru
        _
    $region12: #{vlad_forward.1} parent=5 // pred_fallthru
      _
    %p188 = scmp.lt.s32.totalorder %s11, 2
    // Predicated region
    $region29: #{vlad_forward.1} parent=5 // pred_check
      %p189 = pneg %p188
    $region30: #{vlad_forward.1} parent=5 // pred_check_branch
      %191 = sbr.rel (%p189) target = $region32
    $region31: #{vlad_forward.1} parent=5 // pred_region
      // Predicated region
      $region33: #{vlad_forward.1} parent=31 // pred_check
        %p192 = pneg %p45
      $region34: #{vlad_forward.1} parent=31 // pred_check_branch
        %194 = sbr.rel (%p192) target = $region36
      $region35: #{vlad_forward.1} parent=31 // pred_region
        %p195 = scmp.lt.s32.totalorder %s18, 1
        %s196 = scalar_select %p195, %s18, 1
        %p197 = scmp.lt.s32.totalorder %s19, 0
        %s198 = scalar_select %p197, %s19, 0
        %s199 = smul.addr %s196, 4
        %s200 = sadd.s32 %s198, %s199
        %s201 = smul.addr %s200, 8
        %s202 = scalar_lea.vmem %s0, %s201
      $region36: #{vlad_forward.1} parent=31 // pred_fallthru
        _
    $region32: #{vlad_forward.1} parent=5 // pred_fallthru
      _
    %p203 = scmp.le.s32.totalorder 1, %s11
    %p204 = scmp.lt.s32.totalorder %s11, 3
    %p205 = pnand %p203, %p204
    %p206 = pneg %p205
    // Predicated region
    $region37: #{vlad_forward.1} parent=5 // pred_check
      _
    $region38: #{vlad_forward.1} parent=5 // pred_check_branch
      %208 = sbr.rel (%p205) target = $region40
    $region39: #{vlad_forward.1} parent=5 // pred_region
      %s209 = ssub.s32 %s11, 1
      %p210 = scmp.lt.s32.totalorder %s20, 1
      %s211 = scalar_select %p210, %s20, 1
      %p212 = scmp.lt.s32.totalorder %s21, 0
      %s213 = scalar_select %p212, %s21, 0
      %s214 = smul.addr %s211, 4
      %s215 = sadd.s32 %s213, %s214
      %s216 = smul.addr %s215, 8
      %s217 = scalar_lea.vmem %s0, %s216
      %p218 = pneg %p51
      %p219 = pneg %p48
      %p220 = pneg %p72
      %p221 = pneg %p69
      %p222 = pneg %p93
      %p223 = pneg %p90
      %p224 = pneg %p114
      %p225 = pneg %p111
      %p226 = pneg %p135
      %p227 = pneg %p132
      %p228 = pneg %p161
      %p229 = pneg %p158
      %p230 = scmp.lt.s32.totalorder %s20, 1
      %s231 = scalar_select %p230, %s20, 1
      %s232 = smul.addr %s231, 16
      %s233 = smul.addr %s232, 8
      %s234 = scalar_lea.vmem %s5, %s233
      %p235 = scmp.lt.s32.totalorder %s20, 1
      %s236 = scalar_select %p235, %s20, 1
      %p237 = scmp.lt.s32.totalorder %s21, 0
      %s238 = scalar_select %p237, %s21, 0
      %s239 = smul.addr %s236, 4
      %s240 = sadd.s32 %s238, %s239
      %s241 = smul.addr %s240, 8
      %s242 = scalar_lea.vmem %s0, %s241
      %p243 = scmp.lt.s32.totalorder %s20, 1
      %s244 = scalar_select %p243, %s20, 1
      %s245 = smul.addr %s244, 16
      %s246 = smul.addr %s245, 8
      %s247 = scalar_lea.vmem %s5, %s246
      %p248 = scmp.eq.s32.totalorder %s21, 0
      // Predicated region
      $region41: #{vlad_forward.1} parent=39 // pred_check
        %p249 = pneg %p248
      $region42: #{vlad_forward.1} parent=39 // pred_check_branch
        %251 = sbr.rel (%p249) target = $region44
      $region43: #{vlad_forward.1} parent=39 // pred_region
        %vm252 = vcmask 261120
        %253 = vst.msk [vmem:[#allocation2] sm:$0xff] %vm252, 0.0
        %254 = vst.msk [vmem:[#allocation2 + $0x8] sm:$0xff] %vm252, 0.0
        %255 = vst.msk [vmem:[#allocation2 + $0x10] sm:$0xff] %vm252, 0.0
        %256 = vst.msk [vmem:[#allocation2 + $0x18] sm:$0xff] %vm252, 0.0
        %257 = vst.msk [vmem:[#allocation2 + $0x20] sm:$0xff] %vm252, 0.0
        %258 = vst.msk [vmem:[#allocation2 + $0x28] sm:$0xff] %vm252, 0.0
        %259 = vst.msk [vmem:[#allocation2 + $0x30] sm:$0xff] %vm252, 0.0
        %260 = vst.msk [vmem:[#allocation2 + $0x38] sm:$0xff] %vm252, 0.0
        %261 = vst.msk [vmem:[#allocation2 + $0x40] sm:$0xff] %vm252, 0.0
        %262 = vst.msk [vmem:[#allocation2 + $0x48] sm:$0xff] %vm252, 0.0
        %263 = vst.msk [vmem:[#allocation2 + $0x50] sm:$0xff] %vm252, 0.0
        %264 = vst.msk [vmem:[#allocation2 + $0x58] sm:$0xff] %vm252, 0.0
        %265 = vst.msk [vmem:[#allocation2 + $0x60] sm:$0xff] %vm252, 0.0
        %266 = vst.msk [vmem:[#allocation2 + $0x68] sm:$0xff] %vm252, 0.0
        %267 = vst.msk [vmem:[#allocation2 + $0x70] sm:$0xff] %vm252, 0.0
        %268 = vst.msk [vmem:[#allocation2 + $0x78] sm:$0xff] %vm252, 0.0
        %vm269 = vcmask 7168
        %270 = vst.msk [vmem:[#allocation3] sm:$0xff] %vm269, 0.0
        %271 = vst.msk [vmem:[#allocation3 + $0x8] sm:$0xff] %vm269, 0.0
        %272 = vst.msk [vmem:[#allocation3 + $0x10] sm:$0xff] %vm269, 0.0
        %273 = vst.msk [vmem:[#allocation3 + $0x18] sm:$0xff] %vm269, 0.0
        %274 = vst.msk [vmem:[#allocation3 + $0x20] sm:$0xff] %vm269, 0.0
        %275 = vst.msk [vmem:[#allocation3 + $0x28] sm:$0xff] %vm269, 0.0
        %276 = vst.msk [vmem:[#allocation3 + $0x30] sm:$0xff] %vm269, 0.0
        %277 = vst.msk [vmem:[#allocation3 + $0x38] sm:$0xff] %vm269, 0.0
        %278 = vst.msk [vmem:[#allocation3 + $0x40] sm:$0xff] %vm269, 0.0
        %279 = vst.msk [vmem:[#allocation3 + $0x48] sm:$0xff] %vm269, 0.0
        %280 = vst.msk [vmem:[#allocation3 + $0x50] sm:$0xff] %vm269, 0.0
        %281 = vst.msk [vmem:[#allocation3 + $0x58] sm:$0xff] %vm269, 0.0
        %282 = vst.msk [vmem:[#allocation3 + $0x60] sm:$0xff] %vm269, 0.0
        %283 = vst.msk [vmem:[#allocation3 + $0x68] sm:$0xff] %vm269, 0.0
        %284 = vst.msk [vmem:[#allocation3 + $0x70] sm:$0xff] %vm269, 0.0
        %285 = vst.msk [vmem:[#allocation3 + $0x78] sm:$0xff] %vm269, 0.0
      $region44: #{vlad_forward.1} parent=39 // pred_fallthru
        _
      %v286 = vld [vmem:[%s242] sm:$0xff]
      %v287 = vld [vmem:[%s242 + $0x8] sm:$0xff]
      %v288 = vld [vmem:[%s242 + $0x10] sm:$0xff]
      %v289 = vld [vmem:[%s242 + $0x18] sm:$0xff]
      %v290 = vmul.f32 %v286, %v286
      %v291 = vmul.f32 %v287, %v287
      %v292 = vmul.f32 %v288, %v288
      %v293 = vmul.f32 %v289, %v289
      %vm294 = vcmask 523264
      %v295 = vsel %vm294, %v290, 0.0
      %v296 = vsel %vm294, %v291, 0.0
      %v297 = vadd.f32 %v295, %v296
      %v298 = vsel %vm294, %v292, 0.0
      %v299 = vadd.f32 %v297, %v298
      %v300 = vsel %vm294, %v293, 0.0
      %v301 = vadd.f32 %v299, %v300
      %v302 = vrot.slane %v301, 4
      %v303 = vadd.f32 %v301, %v302
      %v304 = vrot.slane %v303, 2
      %v305 = vadd.f32 %v303, %v304
      %v306 = vrot.slane %v305, 1
      %v307 = vadd.f32 %v305, %v306
      %v308 = vld [vmem:[%s2] sm:$0xff]
      %v309 = vld [vmem:[%s2 + $0x8] sm:$0xff]
      %v310 = vld [vmem:[%s2 + $0x10] sm:$0xff]
      %v311 = vld [vmem:[%s2 + $0x18] sm:$0xff]
      %v312 = vld [vmem:[%s2 + $0x20] sm:$0xff]
      %v313 = vld [vmem:[%s2 + $0x28] sm:$0xff]
      %v314 = vld [vmem:[%s2 + $0x30] sm:$0xff]
      %v315 = vld [vmem:[%s2 + $0x38] sm:$0xff]
      %v316 = vld [vmem:[%s2 + $0x40] sm:$0xff]
      %v317 = vld [vmem:[%s2 + $0x48] sm:$0xff]
      %v318 = vld [vmem:[%s2 + $0x50] sm:$0xff]
      %v319 = vld [vmem:[%s2 + $0x58] sm:$0xff]
      %v320 = vld [vmem:[%s2 + $0x60] sm:$0xff]
      %v321 = vld [vmem:[%s2 + $0x68] sm:$0xff]
      %v322 = vld [vmem:[%s2 + $0x70] sm:$0xff]
      %v323 = vld [vmem:[%s2 + $0x78] sm:$0xff]
      %vm324 = vcmask 261120
      %v326 = vsel %vm324, %v308, 0
      %v329 = vsel %vm324, %v309, 0
      %v332 = vsel %vm324, %v310, 0
      %v335 = vsel %vm324, %v311, 0
      %v338 = vsel %vm324, %v312, 0
      %v341 = vsel %vm324, %v313, 0
      %v344 = vsel %vm324, %v314, 0
      %v347 = vsel %vm324, %v315, 0
      %v350 = vsel %vm324, %v316, 0
      %v353 = vsel %vm324, %v317, 0
      %v356 = vsel %vm324, %v318, 0
      %v359 = vsel %vm324, %v319, 0
      %v362 = vsel %vm324, %v320, 0
      %v365 = vsel %vm324, %v321, 0
      %v368 = vsel %vm324, %v322, 0
      %v371 = vsel %vm324, %v323, 0
      %373 = vmatprep.subr.mxu0 0.0
      %374 = vmatpush1.msra.mxu0 %v286
      %375 = vmatprep.subr.mxu0 0.0
      %376 = vmatpush1.msra.mxu0 %v287
      %377 = vmatprep.subr.mxu0 0.0
      %378 = vmatpush1.msra.mxu0 %v288
      %379 = vmatprep.subr.mxu0 0.0
      %380 = vmatpush1.msra.mxu0 %v289
      %381 = vmatprep.subr.mxu0 0.0
      %382 = vmatpush1.msra.mxu0 0.0
      %383 = vmatprep.subr.mxu0 0.0
      %384 = vmatpush1.msra.mxu0 0.0
      %385 = vmatprep.subr.mxu0 0.0
      %386 = vmatpush1.msra.mxu0 0.0
      %387 = vmatprep.subr.mxu0 0.0
      %388 = vmatpush1.msra.mxu0 0.0
      %389 = vmatprep.subr.mxu0 0.0
      %390 = vmatpush1.msra.mxu0 0.0
      %391 = vmatprep.subr.mxu0 0.0
      %392 = vmatpush1.msra.mxu0 0.0
      %393 = vmatprep.subr.mxu0 0.0
      %394 = vmatpush1.msra.mxu0 0.0
      %395 = vmatprep.subr.mxu0 0.0
      %396 = vmatpush1.msra.mxu0 0.0
      %397 = vmatprep.subr.mxu0 0.0
      %398 = vmatpush1.msra.mxu0 0.0
      %399 = vmatprep.subr.mxu0 0.0
      %400 = vmatpush1.msra.mxu0 0.0
      %401 = vmatprep.subr.mxu0 0.0
      %402 = vmatpush1.msra.mxu0 0.0
      %403 = vmatprep.subr.mxu0 0.0
      %404 = vmatpush1.msra.mxu0 0.0
      %405 = vmatprep.subr.mxu0 0.0
      %406 = vmatpush1.msra.mxu0 0.0
      %407 = vmatprep.subr.mxu0 0.0
      %408 = vmatpush1.msra.mxu0 0.0
      %409 = vmatprep.subr.mxu0 0.0
      %410 = vmatpush1.msra.mxu0 0.0
      %411 = vmatprep.subr.mxu0 0.0
      %412 = vmatpush1.msra.mxu0 0.0
      %413 = vmatprep.subr.mxu0 0.0
      %414 = vmatpush1.msra.mxu0 0.0
      %415 = vmatprep.subr.mxu0 0.0
      %416 = vmatpush1.msra.mxu0 0.0
      %417 = vmatprep.subr.mxu0 0.0
      %418 = vmatpush1.msra.mxu0 0.0
      %419 = vmatprep.subr.mxu0 0.0
      %420 = vmatpush1.msra.mxu0 0.0
      %421 = vmatprep.subr.mxu0 0.0
      %422 = vmatpush1.msra.mxu0 0.0
      %423 = vmatprep.subr.mxu0 0.0
      %424 = vmatpush1.msra.mxu0 0.0
      %425 = vmatprep.subr.mxu0 0.0
      %426 = vmatpush1.msra.mxu0 0.0
      %427 = vmatprep.subr.mxu0 0.0
      %428 = vmatpush1.msra.mxu0 0.0
      %429 = vmatprep.subr.mxu0 0.0
      %430 = vmatpush1.msra.mxu0 0.0
      %431 = vmatprep.subr.mxu0 0.0
      %432 = vmatpush1.msra.mxu0 0.0
      %433 = vmatprep.subr.mxu0 0.0
      %434 = vmatpush1.msra.mxu0 0.0
      %435 = vmatprep.subr.mxu0 0.0
      %436 = vmatpush1.msra.mxu0 0.0
      %437 = vmatprep.mubr.f32.mxu0 0.0
      %438 = vmatmul.mubr.f32.gmra.mrb[0].mxu0 %v326
      %v439 = vpop.f32.mrb[0].mxu0
      %v440 = vadd.f32 0.0, %v439
      %v441 = vpop.f32.mrb[0].mxu0
      %442 = vmatprep.mubr.f32.mxu0 0.0
      %443 = vmatmul.mubr.f32.gmra.mrb[0].mxu0 %v329
      %v444 = vpop.f32.mrb[0].mxu0
      %v445 = vadd.f32 0.0, %v444
      %v446 = vpop.f32.mrb[0].mxu0
      %447 = vmatprep.mubr.f32.mxu0 0.0
      %448 = vmatmul.mubr.f32.gmra.mrb[0].mxu0 %v332
      %v449 = vpop.f32.mrb[0].mxu0
      %v450 = vadd.f32 0.0, %v449
      %v451 = vpop.f32.mrb[0].mxu0
      %452 = vmatprep.mubr.f32.mxu0 0.0
      %453 = vmatmul.mubr.f32.gmra.mrb[0].mxu0 %v335
      %v454 = vpop.f32.mrb[0].mxu0
      %v455 = vadd.f32 0.0, %v454
      %v456 = vpop.f32.mrb[0].mxu0
      %457 = vmatprep.mubr.f32.mxu0 0.0
      %458 = vmatmul.mubr.f32.gmra.mrb[0].mxu0 %v338
      %v459 = vpop.f32.mrb[0].mxu0
      %v460 = vadd.f32 0.0, %v459
      %v461 = vpop.f32.mrb[0].mxu0
      %462 = vmatprep.mubr.f32.mxu0 0.0
      %463 = vmatmul.mubr.f32.gmra.mrb[0].mxu0 %v341
      %v464 = vpop.f32.mrb[0].mxu0
      %v465 = vadd.f32 0.0, %v464
      %v466 = vpop.f32.mrb[0].mxu0
      %467 = vmatprep.mubr.f32.mxu0 0.0
      %468 = vmatmul.mubr.f32.gmra.mrb[0].mxu0 %v344
      %v469 = vpop.f32.mrb[0].mxu0
      %v470 = vadd.f32 0.0, %v469
      %v471 = vpop.f32.mrb[0].mxu0
      %472 = vmatprep.mubr.f32.mxu0 0.0
      %473 = vmatmul.mubr.f32.gmra.mrb[0].mxu0 %v347
      %v474 = vpop.f32.mrb[0].mxu0
      %v475 = vadd.f32 0.0, %v474
      %v476 = vpop.f32.mrb[0].mxu0
      %477 = vmatprep.mubr.f32.mxu0 0.0
      %478 = vmatmul.mubr.f32.gmra.mrb[0].mxu0 %v350
      %v479 = vpop.f32.mrb[0].mxu0
      %v480 = vadd.f32 0.0, %v479
      %v481 = vpop.f32.mrb[0].mxu0
      %482 = vmatprep.mubr.f32.mxu0 0.0
      %483 = vmatmul.mubr.f32.gmra.mrb[0].mxu0 %v353
      %v484 = vpop.f32.mrb[0].mxu0
      %v485 = vadd.f32 0.0, %v484
      %v486 = vpop.f32.mrb[0].mxu0
      %487 = vmatprep.mubr.f32.mxu0 0.0
      %488 = vmatmul.mubr.f32.gmra.mrb[0].mxu0 %v356
      %v489 = vpop.f32.mrb[0].mxu0
      %v490 = vadd.f32 0.0, %v489
      %v491 = vpop.f32.mrb[0].mxu0
      %492 = vmatprep.mubr.f32.mxu0 0.0
      %493 = vmatmul.mubr.f32.gmra.mrb[0].mxu0 %v359
      %v494 = vpop.f32.mrb[0].mxu0
      %v495 = vadd.f32 0.0, %v494
      %v496 = vpop.f32.mrb[0].mxu0
      %497 = vmatprep.mubr.f32.mxu0 0.0
      %498 = vmatmul.mubr.f32.gmra.mrb[0].mxu0 %v362
      %v499 = vpop.f32.mrb[0].mxu0
      %v500 = vadd.f32 0.0, %v499
      %v501 = vpop.f32.mrb[0].mxu0
      %502 = vmatprep.mubr.f32.mxu0 0.0
      %503 = vmatmul.mubr.f32.gmra.mrb[0].mxu0 %v365
      %v504 = vpop.f32.mrb[0].mxu0
      %v505 = vadd.f32 0.0, %v504
      %v506 = vpop.f32.mrb[0].mxu0
      %507 = vmatprep.mubr.f32.mxu0 0.0
      %508 = vmatmul.mubr.f32.gmra.mrb[0].mxu0 %v368
      %v509 = vpop.f32.mrb[0].mxu0
      %v510 = vadd.f32 0.0, %v509
      %v511 = vpop.f32.mrb[0].mxu0
      %512 = vmatprep.mubr.f32.mxu0 0.0
      %513 = vmatmul.mubr.f32.gmra.mrb[0].mxu0 %v371
      %v514 = vpop.f32.mrb[0].mxu0
      %v515 = vadd.f32 0.0, %v514
      %v516 = vpop.f32.mrb[0].mxu0
      %517 = vdwg.mxu0
      %v518 = vld [vmem:[%s4] sm:$0xff]
      %v519 = vld [vmem:[%s4 + $0x8] sm:$0xff]
      %v520 = vld [vmem:[%s4 + $0x10] sm:$0xff]
      %v521 = vld [vmem:[%s4 + $0x18] sm:$0xff]
      %v522 = vld [vmem:[%s4 + $0x20] sm:$0xff]
      %v523 = vld [vmem:[%s4 + $0x28] sm:$0xff]
      %v524 = vld [vmem:[%s4 + $0x30] sm:$0xff]
      %v525 = vld [vmem:[%s4 + $0x38] sm:$0xff]
      %v526 = vld [vmem:[%s4 + $0x40] sm:$0xff]
      %v527 = vld [vmem:[%s4 + $0x48] sm:$0xff]
      %v528 = vld [vmem:[%s4 + $0x50] sm:$0xff]
      %v529 = vld [vmem:[%s4 + $0x58] sm:$0xff]
      %v530 = vld [vmem:[%s4 + $0x60] sm:$0xff]
      %v531 = vld [vmem:[%s4 + $0x68] sm:$0xff]
      %v532 = vld [vmem:[%s4 + $0x70] sm:$0xff]
      %v533 = vld [vmem:[%s4 + $0x78] sm:$0xff]
      %535 = vset.pattern.permute.xlu0 0
      %536 = vperm.xlu0 %535, %v518
      %v537 = vpop.permute.xlu0 %536
      %540 = vset.pattern.permute.xlu0 0
      %541 = vperm.xlu0 %540, %v519
      %v542 = vpop.permute.xlu0 %541
      %545 = vset.pattern.permute.xlu0 0
      %546 = vperm.xlu0 %545, %v520
      %v547 = vpop.permute.xlu0 %546
      %550 = vset.pattern.permute.xlu0 0
      %551 = vperm.xlu0 %550, %v521
      %v552 = vpop.permute.xlu0 %551
      %555 = vset.pattern.permute.xlu0 0
      %556 = vperm.xlu0 %555, %v522
      %v557 = vpop.permute.xlu0 %556
      %560 = vset.pattern.permute.xlu0 0
      %561 = vperm.xlu0 %560, %v523
      %v562 = vpop.permute.xlu0 %561
      %565 = vset.pattern.permute.xlu0 0
      %566 = vperm.xlu0 %565, %v524
      %v567 = vpop.permute.xlu0 %566
      %570 = vset.pattern.permute.xlu0 0
      %571 = vperm.xlu0 %570, %v525
      %v572 = vpop.permute.xlu0 %571
      %575 = vset.pattern.permute.xlu0 0
      %576 = vperm.xlu0 %575, %v526
      %v577 = vpop.permute.xlu0 %576
      %580 = vset.pattern.permute.xlu0 0
      %581 = vperm.xlu0 %580, %v527
      %v582 = vpop.permute.xlu0 %581
      %585 = vset.pattern.permute.xlu0 0
      %586 = vperm.xlu0 %585, %v528
      %v587 = vpop.permute.xlu0 %586
      %590 = vset.pattern.permute.xlu0 0
      %591 = vperm.xlu0 %590, %v529
      %v592 = vpop.permute.xlu0 %591
      %595 = vset.pattern.permute.xlu0 0
      %596 = vperm.xlu0 %595, %v530
      %v597 = vpop.permute.xlu0 %596
      %600 = vset.pattern.permute.xlu0 0
      %601 = vperm.xlu0 %600, %v531
      %v602 = vpop.permute.xlu0 %601
      %605 = vset.pattern.permute.xlu0 0
      %606 = vperm.xlu0 %605, %v532
      %v607 = vpop.permute.xlu0 %606
      %610 = vset.pattern.permute.xlu0 0
      %611 = vperm.xlu0 %610, %v533
      %v612 = vpop.permute.xlu0 %611
      %v614 = vmul.f32 %v537, %v307
      %v615 = vmul.f32 %v542, %v307
      %v616 = vmul.f32 %v547, %v307
      %v617 = vmul.f32 %v552, %v307
      %v618 = vmul.f32 %v557, %v307
      %v619 = vmul.f32 %v562, %v307
      %v620 = vmul.f32 %v567, %v307
      %v621 = vmul.f32 %v572, %v307
      %v622 = vmul.f32 %v577, %v307
      %v623 = vmul.f32 %v582, %v307
      %v624 = vmul.f32 %v587, %v307
      %v625 = vmul.f32 %v592, %v307
      %v626 = vmul.f32 %v597, %v307
      %v627 = vmul.f32 %v602, %v307
      %v628 = vmul.f32 %v607, %v307
      %v629 = vmul.f32 %v612, %v307
      %v630 = vsub.f32 %v614, %v440
      %v631 = vsub.f32 %v615, %v445
      %v632 = vsub.f32 %v616, %v450
      %v633 = vsub.f32 %v617, %v455
      %v634 = vsub.f32 %v618, %v460
      %v635 = vsub.f32 %v619, %v465
      %v636 = vsub.f32 %v620, %v470
      %v637 = vsub.f32 %v621, %v475
      %v638 = vsub.f32 %v622, %v480
      %v639 = vsub.f32 %v623, %v485
      %v640 = vsub.f32 %v624, %v490
      %v641 = vsub.f32 %v625, %v495
      %v642 = vsub.f32 %v626, %v500
      %v643 = vsub.f32 %v627, %v505
      %v644 = vsub.f32 %v628, %v510
      %v645 = vsub.f32 %v629, %v515
      %v646 = vld [vmem:[%s3] sm:$0xff]
      %v647 = vld [vmem:[%s3 + $0x8] sm:$0xff]
      %v648 = vld [vmem:[%s3 + $0x10] sm:$0xff]
      %v649 = vld [vmem:[%s3 + $0x18] sm:$0xff]
      %v650 = vld [vmem:[%s3 + $0x20] sm:$0xff]
      %v651 = vld [vmem:[%s3 + $0x28] sm:$0xff]
      %v652 = vld [vmem:[%s3 + $0x30] sm:$0xff]
      %v653 = vld [vmem:[%s3 + $0x38] sm:$0xff]
      %v654 = vld [vmem:[%s3 + $0x40] sm:$0xff]
      %v655 = vld [vmem:[%s3 + $0x48] sm:$0xff]
      %v656 = vld [vmem:[%s3 + $0x50] sm:$0xff]
      %v657 = vld [vmem:[%s3 + $0x58] sm:$0xff]
      %v658 = vld [vmem:[%s3 + $0x60] sm:$0xff]
      %v659 = vld [vmem:[%s3 + $0x68] sm:$0xff]
      %v660 = vld [vmem:[%s3 + $0x70] sm:$0xff]
      %v661 = vld [vmem:[%s3 + $0x78] sm:$0xff]
      %663 = vset.pattern.permute.xlu0 0
      %664 = vperm.xlu0 %663, %v646
      %v665 = vpop.permute.xlu0 %664
      %668 = vset.pattern.permute.xlu0 0
      %669 = vperm.xlu0 %668, %v647
      %v670 = vpop.permute.xlu0 %669
      %673 = vset.pattern.permute.xlu0 0
      %674 = vperm.xlu0 %673, %v648
      %v675 = vpop.permute.xlu0 %674
      %678 = vset.pattern.permute.xlu0 0
      %679 = vperm.xlu0 %678, %v649
      %v680 = vpop.permute.xlu0 %679
      %683 = vset.pattern.permute.xlu0 0
      %684 = vperm.xlu0 %683, %v650
      %v685 = vpop.permute.xlu0 %684
      %688 = vset.pattern.permute.xlu0 0
      %689 = vperm.xlu0 %688, %v651
      %v690 = vpop.permute.xlu0 %689
      %693 = vset.pattern.permute.xlu0 0
      %694 = vperm.xlu0 %693, %v652
      %v695 = vpop.permute.xlu0 %694
      %698 = vset.pattern.permute.xlu0 0
      %699 = vperm.xlu0 %698, %v653
      %v700 = vpop.permute.xlu0 %699
      %703 = vset.pattern.permute.xlu0 0
      %704 = vperm.xlu0 %703, %v654
      %v705 = vpop.permute.xlu0 %704
      %708 = vset.pattern.permute.xlu0 0
      %709 = vperm.xlu0 %708, %v655
      %v710 = vpop.permute.xlu0 %709
      %713 = vset.pattern.permute.xlu0 0
      %714 = vperm.xlu0 %713, %v656
      %v715 = vpop.permute.xlu0 %714
      %718 = vset.pattern.permute.xlu0 0
      %719 = vperm.xlu0 %718, %v657
      %v720 = vpop.permute.xlu0 %719
      %723 = vset.pattern.permute.xlu0 0
      %724 = vperm.xlu0 %723, %v658
      %v725 = vpop.permute.xlu0 %724
      %728 = vset.pattern.permute.xlu0 0
      %729 = vperm.xlu0 %728, %v659
      %v730 = vpop.permute.xlu0 %729
      %733 = vset.pattern.permute.xlu0 0
      %734 = vperm.xlu0 %733, %v660
      %v735 = vpop.permute.xlu0 %734
      %738 = vset.pattern.permute.xlu0 0
      %739 = vperm.xlu0 %738, %v661
      %v740 = vpop.permute.xlu0 %739
      %v742 = vadd.f32 %v630, %v665
      %v743 = vadd.f32 %v631, %v670
      %v744 = vadd.f32 %v632, %v675
      %v745 = vadd.f32 %v633, %v680
      %v746 = vadd.f32 %v634, %v685
      %v747 = vadd.f32 %v635, %v690
      %v748 = vadd.f32 %v636, %v695
      %v749 = vadd.f32 %v637, %v700
      %v750 = vadd.f32 %v638, %v705
      %v751 = vadd.f32 %v639, %v710
      %v752 = vadd.f32 %v640, %v715
      %v753 = vadd.f32 %v641, %v720
      %v754 = vadd.f32 %v642, %v725
      %v755 = vadd.f32 %v643, %v730
      %v756 = vadd.f32 %v644, %v735
      %v757 = vadd.f32 %v645, %v740
      %v758 = vsel %vm294, %v742, -inf
      %v759 = vsel %vm294, %v743, -inf
      %v760 = vsel %vm294, %v744, -inf
      %v761 = vsel %vm294, %v745, -inf
      %v762 = vsel %vm294, %v746, -inf
      %v763 = vmax.f32 %v758, %v762
      %v764 = vsel %vm294, %v747, -inf
      %v765 = vmax.f32 %v759, %v764
      %v766 = vsel %vm294, %v748, -inf
      %v767 = vmax.f32 %v760, %v766
      %v768 = vsel %vm294, %v749, -inf
      %v769 = vmax.f32 %v761, %v768
      %v770 = vsel %vm294, %v750, -inf
      %v771 = vmax.f32 %v763, %v770
      %v772 = vsel %vm294, %v751, -inf
      %v773 = vmax.f32 %v765, %v772
      %v774 = vsel %vm294, %v752, -inf
      %v775 = vmax.f32 %v767, %v774
      %v776 = vsel %vm294, %v753, -inf
      %v777 = vmax.f32 %v769, %v776
      %v778 = vsel %vm294, %v754, -inf
      %v779 = vmax.f32 %v771, %v778
      %v780 = vsel %vm294, %v755, -inf
      %v781 = vmax.f32 %v773, %v780
      %v782 = vsel %vm294, %v756, -inf
      %v783 = vmax.f32 %v775, %v782
      %v784 = vsel %vm294, %v757, -inf
      %v785 = vmax.f32 %v777, %v784
      %v786 = vmax.f32 %v779, %v781
      %v787 = vmax.f32 %v783, %v785
      %v788 = vmax.f32 %v786, %v787
      %v789 = vrot.slane %v788, 4
      %v790 = vmax.f32 %v788, %v789
      %v791 = vrot.slane %v790, 2
      %v792 = vmax.f32 %v790, %v791
      %v793 = vrot.slane %v792, 1
      %v794 = vmax.f32 %v792, %v793
      %v795 = vsub.f32 %v742, %v794
      %v796 = vsub.f32 %v743, %v794
      %v797 = vsub.f32 %v744, %v794
      %v798 = vsub.f32 %v745, %v794
      %v799 = vsub.f32 %v746, %v794
      %v800 = vsub.f32 %v747, %v794
      %v801 = vsub.f32 %v748, %v794
      %v802 = vsub.f32 %v749, %v794
      %v803 = vsub.f32 %v750, %v794
      %v804 = vsub.f32 %v751, %v794
      %v805 = vsub.f32 %v752, %v794
      %v806 = vsub.f32 %v753, %v794
      %v807 = vsub.f32 %v754, %v794
      %v808 = vsub.f32 %v755, %v794
      %v809 = vsub.f32 %v756, %v794
      %v810 = vsub.f32 %v757, %v794
      %v811 = vmul.f32 %v795, 1.442695
      %v812 = vpow.pop %v811
      %v813 = vmul.f32 %v796, 1.442695
      %v814 = vpow.pop %v813
      %v815 = vmul.f32 %v797, 1.442695
      %v816 = vpow.pop %v815
      %v817 = vmul.f32 %v798, 1.442695
      %v818 = vpow.pop %v817
      %v819 = vmul.f32 %v799, 1.442695
      %v820 = vpow.pop %v819
      %v821 = vmul.f32 %v800, 1.442695
      %v822 = vpow.pop %v821
      %v823 = vmul.f32 %v801, 1.442695
      %v824 = vpow.pop %v823
      %v825 = vmul.f32 %v802, 1.442695
      %v826 = vpow.pop %v825
      %v827 = vmul.f32 %v803, 1.442695
      %v828 = vpow.pop %v827
      %v829 = vmul.f32 %v804, 1.442695
      %v830 = vpow.pop %v829
      %v831 = vmul.f32 %v805, 1.442695
      %v832 = vpow.pop %v831
      %v833 = vmul.f32 %v806, 1.442695
      %v834 = vpow.pop %v833
      %v835 = vmul.f32 %v807, 1.442695
      %v836 = vpow.pop %v835
      %v837 = vmul.f32 %v808, 1.442695
      %v838 = vpow.pop %v837
      %v839 = vmul.f32 %v809, 1.442695
      %v840 = vpow.pop %v839
      %v841 = vmul.f32 %v810, 1.442695
      %v842 = vpow.pop %v841
      %v843 = vsel %vm294, %v812, 0.0
      %v844 = vsel %vm294, %v814, 0.0
      %v845 = vadd.f32 %v843, %v844
      %v846 = vsel %vm294, %v816, 0.0
      %v847 = vadd.f32 %v845, %v846
      %v848 = vsel %vm294, %v818, 0.0
      %v849 = vadd.f32 %v847, %v848
      %v850 = vsel %vm294, %v820, 0.0
      %v851 = vadd.f32 %v849, %v850
      %v852 = vsel %vm294, %v822, 0.0
      %v853 = vadd.f32 %v851, %v852
      %v854 = vsel %vm294, %v824, 0.0
      %v855 = vadd.f32 %v853, %v854
      %v856 = vsel %vm294, %v826, 0.0
      %v857 = vadd.f32 %v855, %v856
      %v858 = vsel %vm294, %v828, 0.0
      %v859 = vadd.f32 %v857, %v858
      %v860 = vsel %vm294, %v830, 0.0
      %v861 = vadd.f32 %v859, %v860
      %v862 = vsel %vm294, %v832, 0.0
      %v863 = vadd.f32 %v861, %v862
      %v864 = vsel %vm294, %v834, 0.0
      %v865 = vadd.f32 %v863, %v864
      %v866 = vsel %vm294, %v836, 0.0
      %v867 = vadd.f32 %v865, %v866
      %v868 = vsel %vm294, %v838, 0.0
      %v869 = vadd.f32 %v867, %v868
      %v870 = vsel %vm294, %v840, 0.0
      %v871 = vadd.f32 %v869, %v870
      %v872 = vsel %vm294, %v842, 0.0
      %v873 = vadd.f32 %v871, %v872
      %v874 = vrot.slane %v873, 4
      %v875 = vadd.f32 %v873, %v874
      %v876 = vrot.slane %v875, 2
      %v877 = vadd.f32 %v875, %v876
      %v878 = vrot.slane %v877, 1
      %v879 = vadd.f32 %v877, %v878
      %v880 = vrcp.pop %v879
      %v881 = vmul.f32 %v879, %v880
      %v882 = vsub.f32 2.0, %v881
      %v883 = vmul.f32 %v880, %v882
      %v884 = vmul.f32 %v812, %v883
      %v885 = vmul.f32 %v814, %v883
      %v886 = vmul.f32 %v816, %v883
      %v887 = vmul.f32 %v818, %v883
      %v888 = vmul.f32 %v820, %v883
      %v889 = vmul.f32 %v822, %v883
      %v890 = vmul.f32 %v824, %v883
      %v891 = vmul.f32 %v826, %v883
      %v892 = vmul.f32 %v828, %v883
      %v893 = vmul.f32 %v830, %v883
      %v894 = vmul.f32 %v832, %v883
      %v895 = vmul.f32 %v834, %v883
      %v896 = vmul.f32 %v836, %v883
      %v897 = vmul.f32 %v838, %v883
      %v898 = vmul.f32 %v840, %v883
      %v899 = vmul.f32 %v842, %v883
      %v900 = vld [vmem:[#allocation2] sm:$0xff]
      %v901 = vld [vmem:[#allocation2 + $0x8] sm:$0xff]
      %v902 = vld [vmem:[#allocation2 + $0x10] sm:$0xff]
      %v903 = vld [vmem:[#allocation2 + $0x18] sm:$0xff]
      %v904 = vld [vmem:[#allocation2 + $0x20] sm:$0xff]
      %v905 = vld [vmem:[#allocation2 + $0x28] sm:$0xff]
      %v906 = vld [vmem:[#allocation2 + $0x30] sm:$0xff]
      %v907 = vld [vmem:[#allocation2 + $0x38] sm:$0xff]
      %v908 = vld [vmem:[#allocation2 + $0x40] sm:$0xff]
      %v909 = vld [vmem:[#allocation2 + $0x48] sm:$0xff]
      %v910 = vld [vmem:[#allocation2 + $0x50] sm:$0xff]
      %v911 = vld [vmem:[#allocation2 + $0x58] sm:$0xff]
      %v912 = vld [vmem:[#allocation2 + $0x60] sm:$0xff]
      %v913 = vld [vmem:[#allocation2 + $0x68] sm:$0xff]
      %v914 = vld [vmem:[#allocation2 + $0x70] sm:$0xff]
      %v915 = vld [vmem:[#allocation2 + $0x78] sm:$0xff]
      %v917 = vsel %vm294, %v884, 0
      %v920 = vsel %vm294, %v885, 0
      %v923 = vsel %vm294, %v886, 0
      %v926 = vsel %vm294, %v887, 0
      %v929 = vsel %vm294, %v888, 0
      %v932 = vsel %vm294, %v889, 0
      %v935 = vsel %vm294, %v890, 0
      %v938 = vsel %vm294, %v891, 0
      %v941 = vsel %vm294, %v892, 0
      %v944 = vsel %vm294, %v893, 0
      %v947 = vsel %vm294, %v894, 0
      %v950 = vsel %vm294, %v895, 0
      %v953 = vsel %vm294, %v896, 0
      %v956 = vsel %vm294, %v897, 0
      %v959 = vsel %vm294, %v898, 0
      %v962 = vsel %vm294, %v899, 0
      %v965 = vsel %vm294, %v286, 0
      %v968 = vsel %vm294, %v287, 0
      %v971 = vsel %vm294, %v288, 0
      %v974 = vsel %vm294, %v289, 0
      %976 = vmatprep.subr.mxu0 0.0
      %977 = vmatpush1.xpose.msra.mxu0 %v965
      %978 = vmatprep.subr.mxu0 0.0
      %979 = vmatpush1.xpose.msra.mxu0 %v968
      %980 = vmatprep.subr.mxu0 0.0
      %981 = vmatpush1.xpose.msra.mxu0 %v971
      %982 = vmatprep.subr.mxu0 0.0
      %983 = vmatpush1.xpose.msra.mxu0 %v974
      %984 = vmatprep.subr.mxu0 0.0
      %985 = vmatpush1.xpose.msra.mxu0 0.0
      %986 = vmatprep.subr.mxu0 0.0
      %987 = vmatpush1.xpose.msra.mxu0 0.0
      %988 = vmatprep.subr.mxu0 0.0
      %989 = vmatpush1.xpose.msra.mxu0 0.0
      %990 = vmatprep.subr.mxu0 0.0
      %991 = vmatpush1.xpose.msra.mxu0 0.0
      %992 = vmatprep.subr.mxu0 0.0
      %993 = vmatpush1.xpose.msra.mxu0 0.0
      %994 = vmatprep.subr.mxu0 0.0
      %995 = vmatpush1.xpose.msra.mxu0 0.0
      %996 = vmatprep.subr.mxu0 0.0
      %997 = vmatpush1.xpose.msra.mxu0 0.0
      %998 = vmatprep.subr.mxu0 0.0
      %999 = vmatpush1.xpose.msra.mxu0 0.0
      %1000 = vmatprep.subr.mxu0 0.0
      %1001 = vmatpush1.xpose.msra.mxu0 0.0
      %1002 = vmatprep.subr.mxu0 0.0
      %1003 = vmatpush1.xpose.msra.mxu0 0.0
      %1004 = vmatprep.subr.mxu0 0.0
      %1005 = vmatpush1.xpose.msra.mxu0 0.0
      %1006 = vmatprep.subr.mxu0 0.0
      %1007 = vmatpush1.xpose.msra.mxu0 0.0
      %1008 = vmatprep.subr.mxu0 0.0
      %1009 = vmatpush1.xpose.msra.mxu0 0.0
      %1010 = vmatprep.subr.mxu0 0.0
      %1011 = vmatpush1.xpose.msra.mxu0 0.0
      %1012 = vmatprep.subr.mxu0 0.0
      %1013 = vmatpush1.xpose.msra.mxu0 0.0
      %1014 = vmatprep.subr.mxu0 0.0
      %1015 = vmatpush1.xpose.msra.mxu0 0.0
      %1016 = vmatprep.subr.mxu0 0.0
      %1017 = vmatpush1.xpose.msra.mxu0 0.0
      %1018 = vmatprep.subr.mxu0 0.0
      %1019 = vmatpush1.xpose.msra.mxu0 0.0
      %1020 = vmatprep.subr.mxu0 0.0
      %1021 = vmatpush1.xpose.msra.mxu0 0.0
      %1022 = vmatprep.subr.mxu0 0.0
      %1023 = vmatpush1.xpose.msra.mxu0 0.0
      %1024 = vmatprep.subr.mxu0 0.0
      %1025 = vmatpush1.xpose.msra.mxu0 0.0
      %1026 = vmatprep.subr.mxu0 0.0
      %1027 = vmatpush1.xpose.msra.mxu0 0.0
      %1028 = vmatprep.subr.mxu0 0.0
      %1029 = vmatpush1.xpose.msra.mxu0 0.0
      %1030 = vmatprep.subr.mxu0 0.0
      %1031 = vmatpush1.xpose.msra.mxu0 0.0
      %1032 = vmatprep.subr.mxu0 0.0
      %1033 = vmatpush1.xpose.msra.mxu0 0.0
      %1034 = vmatprep.subr.mxu0 0.0
      %1035 = vmatpush1.xpose.msra.mxu0 0.0
      %1036 = vmatprep.subr.mxu0 0.0
      %1037 = vmatpush1.xpose.msra.mxu0 0.0
      %1038 = vmatprep.subr.mxu0 0.0
      %1039 = vmatpush1.xpose.msra.mxu0 0.0
      %1040 = vmatprep.mubr.f32.mxu0 0.0
      %1041 = vmatmul.mubr.f32.gmra.mrb[0].mxu0 %v917
      %v1042 = vpop.f32.mrb[0].mxu0
      %v1043 = vadd.f32 0.0, %v1042
      %v1044 = vpop.f32.mrb[0].mxu0
      %1045 = vmatprep.mubr.f32.mxu0 0.0
      %1046 = vmatmul.mubr.f32.gmra.mrb[0].mxu0 %v920
      %v1047 = vpop.f32.mrb[0].mxu0
      %v1048 = vadd.f32 0.0, %v1047
      %v1049 = vpop.f32.mrb[0].mxu0
      %1050 = vmatprep.mubr.f32.mxu0 0.0
      %1051 = vmatmul.mubr.f32.gmra.mrb[0].mxu0 %v923
      %v1052 = vpop.f32.mrb[0].mxu0
      %v1053 = vadd.f32 0.0, %v1052
      %v1054 = vpop.f32.mrb[0].mxu0
      %1055 = vmatprep.mubr.f32.mxu0 0.0
      %1056 = vmatmul.mubr.f32.gmra.mrb[0].mxu0 %v926
      %v1057 = vpop.f32.mrb[0].mxu0
      %v1058 = vadd.f32 0.0, %v1057
      %v1059 = vpop.f32.mrb[0].mxu0
      %1060 = vmatprep.mubr.f32.mxu0 0.0
      %1061 = vmatmul.mubr.f32.gmra.mrb[0].mxu0 %v929
      %v1062 = vpop.f32.mrb[0].mxu0
      %v1063 = vadd.f32 0.0, %v1062
      %v1064 = vpop.f32.mrb[0].mxu0
      %1065 = vmatprep.mubr.f32.mxu0 0.0
      %1066 = vmatmul.mubr.f32.gmra.mrb[0].mxu0 %v932
      %v1067 = vpop.f32.mrb[0].mxu0
      %v1068 = vadd.f32 0.0, %v1067
      %v1069 = vpop.f32.mrb[0].mxu0
      %1070 = vmatprep.mubr.f32.mxu0 0.0
      %1071 = vmatmul.mubr.f32.gmra.mrb[0].mxu0 %v935
      %v1072 = vpop.f32.mrb[0].mxu0
      %v1073 = vadd.f32 0.0, %v1072
      %v1074 = vpop.f32.mrb[0].mxu0
      %1075 = vmatprep.mubr.f32.mxu0 0.0
      %1076 = vmatmul.mubr.f32.gmra.mrb[0].mxu0 %v938
      %v1077 = vpop.f32.mrb[0].mxu0
      %v1078 = vadd.f32 0.0, %v1077
      %v1079 = vpop.f32.mrb[0].mxu0
      %1080 = vmatprep.mubr.f32.mxu0 0.0
      %1081 = vmatmul.mubr.f32.gmra.mrb[0].mxu0 %v941
      %v1082 = vpop.f32.mrb[0].mxu0
      %v1083 = vadd.f32 0.0, %v1082
      %v1084 = vpop.f32.mrb[0].mxu0
      %1085 = vmatprep.mubr.f32.mxu0 0.0
      %1086 = vmatmul.mubr.f32.gmra.mrb[0].mxu0 %v944
      %v1087 = vpop.f32.mrb[0].mxu0
      %v1088 = vadd.f32 0.0, %v1087
      %v1089 = vpop.f32.mrb[0].mxu0
      %1090 = vmatprep.mubr.f32.mxu0 0.0
      %1091 = vmatmul.mubr.f32.gmra.mrb[0].mxu0 %v947
      %v1092 = vpop.f32.mrb[0].mxu0
      %v1093 = vadd.f32 0.0, %v1092
      %v1094 = vpop.f32.mrb[0].mxu0
      %1095 = vmatprep.mubr.f32.mxu0 0.0
      %1096 = vmatmul.mubr.f32.gmra.mrb[0].mxu0 %v950
      %v1097 = vpop.f32.mrb[0].mxu0
      %v1098 = vadd.f32 0.0, %v1097
      %v1099 = vpop.f32.mrb[0].mxu0
      %1100 = vmatprep.mubr.f32.mxu0 0.0
      %1101 = vmatmul.mubr.f32.gmra.mrb[0].mxu0 %v953
      %v1102 = vpop.f32.mrb[0].mxu0
      %v1103 = vadd.f32 0.0, %v1102
      %v1104 = vpop.f32.mrb[0].mxu0
      %1105 = vmatprep.mubr.f32.mxu0 0.0
      %1106 = vmatmul.mubr.f32.gmra.mrb[0].mxu0 %v956
      %v1107 = vpop.f32.mrb[0].mxu0
      %v1108 = vadd.f32 0.0, %v1107
      %v1109 = vpop.f32.mrb[0].mxu0
      %1110 = vmatprep.mubr.f32.mxu0 0.0
      %1111 = vmatmul.mubr.f32.gmra.mrb[0].mxu0 %v959
      %v1112 = vpop.f32.mrb[0].mxu0
      %v1113 = vadd.f32 0.0, %v1112
      %v1114 = vpop.f32.mrb[0].mxu0
      %1115 = vmatprep.mubr.f32.mxu0 0.0
      %1116 = vmatmul.mubr.f32.gmra.mrb[0].mxu0 %v962
      %v1117 = vpop.f32.mrb[0].mxu0
      %v1118 = vadd.f32 0.0, %v1117
      %v1119 = vpop.f32.mrb[0].mxu0
      %1120 = vdwg.mxu0
      %v1121 = vadd.f32 %v900, %v1043
      %v1122 = vadd.f32 %v901, %v1048
      %v1123 = vadd.f32 %v902, %v1053
      %v1124 = vadd.f32 %v903, %v1058
      %v1125 = vadd.f32 %v904, %v1063
      %v1126 = vadd.f32 %v905, %v1068
      %v1127 = vadd.f32 %v906, %v1073
      %v1128 = vadd.f32 %v907, %v1078
      %v1129 = vadd.f32 %v908, %v1083
      %v1130 = vadd.f32 %v909, %v1088
      %v1131 = vadd.f32 %v910, %v1093
      %v1132 = vadd.f32 %v911, %v1098
      %v1133 = vadd.f32 %v912, %v1103
      %v1134 = vadd.f32 %v913, %v1108
      %v1135 = vadd.f32 %v914, %v1113
      %v1136 = vadd.f32 %v915, %v1118
      %1137 = vst.msk [vmem:[#allocation2] sm:$0xff] %vm324, %v1121
      %1138 = vst.msk [vmem:[#allocation2 + $0x8] sm:$0xff] %vm324, %v1122
      %1139 = vst.msk [vmem:[#allocation2 + $0x10] sm:$0xff] %vm324, %v1123
      %1140 = vst.msk [vmem:[#allocation2 + $0x18] sm:$0xff] %vm324, %v1124
      %1141 = vst.msk [vmem:[#allocation2 + $0x20] sm:$0xff] %vm324, %v1125
      %1142 = vst.msk [vmem:[#allocation2 + $0x28] sm:$0xff] %vm324, %v1126
      %1143 = vst.msk [vmem:[#allocation2 + $0x30] sm:$0xff] %vm324, %v1127
      %1144 = vst.msk [vmem:[#allocation2 + $0x38] sm:$0xff] %vm324, %v1128
      %1145 = vst.msk [vmem:[#allocation2 + $0x40] sm:$0xff] %vm324, %v1129
      %1146 = vst.msk [vmem:[#allocation2 + $0x48] sm:$0xff] %vm324, %v1130
      %1147 = vst.msk [vmem:[#allocation2 + $0x50] sm:$0xff] %vm324, %v1131
      %1148 = vst.msk [vmem:[#allocation2 + $0x58] sm:$0xff] %vm324, %v1132
      %1149 = vst.msk [vmem:[#allocation2 + $0x60] sm:$0xff] %vm324, %v1133
      %1150 = vst.msk [vmem:[#allocation2 + $0x68] sm:$0xff] %vm324, %v1134
      %1151 = vst.msk [vmem:[#allocation2 + $0x70] sm:$0xff] %vm324, %v1135
      %1152 = vst.msk [vmem:[#allocation2 + $0x78] sm:$0xff] %vm324, %v1136
      %v1153 = vld [vmem:[#allocation3] sm:$0xff]
      %v1154 = vld [vmem:[#allocation3 + $0x8] sm:$0xff]
      %v1155 = vld [vmem:[#allocation3 + $0x10] sm:$0xff]
      %v1156 = vld [vmem:[#allocation3 + $0x18] sm:$0xff]
      %v1157 = vld [vmem:[#allocation3 + $0x20] sm:$0xff]
      %v1158 = vld [vmem:[#allocation3 + $0x28] sm:$0xff]
      %v1159 = vld [vmem:[#allocation3 + $0x30] sm:$0xff]
      %v1160 = vld [vmem:[#allocation3 + $0x38] sm:$0xff]
      %v1161 = vld [vmem:[#allocation3 + $0x40] sm:$0xff]
      %v1162 = vld [vmem:[#allocation3 + $0x48] sm:$0xff]
      %v1163 = vld [vmem:[#allocation3 + $0x50] sm:$0xff]
      %v1164 = vld [vmem:[#allocation3 + $0x58] sm:$0xff]
      %v1165 = vld [vmem:[#allocation3 + $0x60] sm:$0xff]
      %v1166 = vld [vmem:[#allocation3 + $0x68] sm:$0xff]
      %v1167 = vld [vmem:[#allocation3 + $0x70] sm:$0xff]
      %v1168 = vld [vmem:[#allocation3 + $0x78] sm:$0xff]
      %v1169 = vsel %vm294, %v884, 0.0
      %1170 = vadd.xlane.f32.xlu0 %v1169
      %v1171 = vpop.xlane.xlu0 %1170
      %v1172 = vsel %vm294, %v885, 0.0
      %1173 = vadd.xlane.f32.xlu0 %v1172
      %v1174 = vpop.xlane.xlu0 %1173
      %v1175 = vsel %vm294, %v886, 0.0
      %1176 = vadd.xlane.f32.xlu0 %v1175
      %v1177 = vpop.xlane.xlu0 %1176
      %v1178 = vsel %vm294, %v887, 0.0
      %1179 = vadd.xlane.f32.xlu0 %v1178
      %v1180 = vpop.xlane.xlu0 %1179
      %v1181 = vsel %vm294, %v888, 0.0
      %1182 = vadd.xlane.f32.xlu0 %v1181
      %v1183 = vpop.xlane.xlu0 %1182
      %v1184 = vsel %vm294, %v889, 0.0
      %1185 = vadd.xlane.f32.xlu0 %v1184
      %v1186 = vpop.xlane.xlu0 %1185
      %v1187 = vsel %vm294, %v890, 0.0
      %1188 = vadd.xlane.f32.xlu0 %v1187
      %v1189 = vpop.xlane.xlu0 %1188
      %v1190 = vsel %vm294, %v891, 0.0
      %1191 = vadd.xlane.f32.xlu0 %v1190
      %v1192 = vpop.xlane.xlu0 %1191
      %v1193 = vsel %vm294, %v892, 0.0
      %1194 = vadd.xlane.f32.xlu0 %v1193
      %v1195 = vpop.xlane.xlu0 %1194
      %v1196 = vsel %vm294, %v893, 0.0
      %1197 = vadd.xlane.f32.xlu0 %v1196
      %v1198 = vpop.xlane.xlu0 %1197
      %v1199 = vsel %vm294, %v894, 0.0
      %1200 = vadd.xlane.f32.xlu0 %v1199
      %v1201 = vpop.xlane.xlu0 %1200
      %v1202 = vsel %vm294, %v895, 0.0
      %1203 = vadd.xlane.f32.xlu0 %v1202
      %v1204 = vpop.xlane.xlu0 %1203
      %v1205 = vsel %vm294, %v896, 0.0
      %1206 = vadd.xlane.f32.xlu0 %v1205
      %v1207 = vpop.xlane.xlu0 %1206
      %v1208 = vsel %vm294, %v897, 0.0
      %1209 = vadd.xlane.f32.xlu0 %v1208
      %v1210 = vpop.xlane.xlu0 %1209
      %v1211 = vsel %vm294, %v898, 0.0
      %1212 = vadd.xlane.f32.xlu0 %v1211
      %v1213 = vpop.xlane.xlu0 %1212
      %v1214 = vsel %vm294, %v899, 0.0
      %1215 = vadd.xlane.f32.xlu0 %v1214
      %v1216 = vpop.xlane.xlu0 %1215
      %v1217 = vadd.f32 %v1153, %v1171
      %v1218 = vadd.f32 %v1154, %v1174
      %v1219 = vadd.f32 %v1155, %v1177
      %v1220 = vadd.f32 %v1156, %v1180
      %v1221 = vadd.f32 %v1157, %v1183
      %v1222 = vadd.f32 %v1158, %v1186
      %v1223 = vadd.f32 %v1159, %v1189
      %v1224 = vadd.f32 %v1160, %v1192
      %v1225 = vadd.f32 %v1161, %v1195
      %v1226 = vadd.f32 %v1162, %v1198
      %v1227 = vadd.f32 %v1163, %v1201
      %v1228 = vadd.f32 %v1164, %v1204
      %v1229 = vadd.f32 %v1165, %v1207
      %v1230 = vadd.f32 %v1166, %v1210
      %v1231 = vadd.f32 %v1167, %v1213
      %v1232 = vadd.f32 %v1168, %v1216
      %vm1233 = vcmask 7168
      %1234 = vst.msk [vmem:[#allocation3] sm:$0xff] %vm1233, %v1217
      %1235 = vst.msk [vmem:[#allocation3 + $0x8] sm:$0xff] %vm1233, %v1218
      %1236 = vst.msk [vmem:[#allocation3 + $0x10] sm:$0xff] %vm1233, %v1219
      %1237 = vst.msk [vmem:[#allocation3 + $0x18] sm:$0xff] %vm1233, %v1220
      %1238 = vst.msk [vmem:[#allocation3 + $0x20] sm:$0xff] %vm1233, %v1221
      %1239 = vst.msk [vmem:[#allocation3 + $0x28] sm:$0xff] %vm1233, %v1222
      %1240 = vst.msk [vmem:[#allocation3 + $0x30] sm:$0xff] %vm1233, %v1223
      %1241 = vst.msk [vmem:[#allocation3 + $0x38] sm:$0xff] %vm1233, %v1224
      %1242 = vst.msk [vmem:[#allocation3 + $0x40] sm:$0xff] %vm1233, %v1225
      %1243 = vst.msk [vmem:[#allocation3 + $0x48] sm:$0xff] %vm1233, %v1226
      %1244 = vst.msk [vmem:[#allocation3 + $0x50] sm:$0xff] %vm1233, %v1227
      %1245 = vst.msk [vmem:[#allocation3 + $0x58] sm:$0xff] %vm1233, %v1228
      %1246 = vst.msk [vmem:[#allocation3 + $0x60] sm:$0xff] %vm1233, %v1229
      %1247 = vst.msk [vmem:[#allocation3 + $0x68] sm:$0xff] %vm1233, %v1230
      %1248 = vst.msk [vmem:[#allocation3 + $0x70] sm:$0xff] %vm1233, %v1231
      %1249 = vst.msk [vmem:[#allocation3 + $0x78] sm:$0xff] %vm1233, %v1232
      // Predicated region
      $region45: #{vlad_forward.1} parent=39 // pred_check
        %p1250 = pneg %p248
      $region46: #{vlad_forward.1} parent=39 // pred_check_branch
        %1252 = sbr.rel (%p1250) target = $region48
      $region47: #{vlad_forward.1} parent=39 // pred_region
        %v1253 = vld [vmem:[#allocation2] sm:$0xff]
        %v1254 = vld [vmem:[#allocation2 + $0x8] sm:$0xff]
        %v1255 = vld [vmem:[#allocation2 + $0x10] sm:$0xff]
        %v1256 = vld [vmem:[#allocation2 + $0x18] sm:$0xff]
        %v1257 = vld [vmem:[#allocation2 + $0x20] sm:$0xff]
        %v1258 = vld [vmem:[#allocation2 + $0x28] sm:$0xff]
        %v1259 = vld [vmem:[#allocation2 + $0x30] sm:$0xff]
        %v1260 = vld [vmem:[#allocation2 + $0x38] sm:$0xff]
        %v1261 = vld [vmem:[#allocation2 + $0x40] sm:$0xff]
        %v1262 = vld [vmem:[#allocation2 + $0x48] sm:$0xff]
        %v1263 = vld [vmem:[#allocation2 + $0x50] sm:$0xff]
        %v1264 = vld [vmem:[#allocation2 + $0x58] sm:$0xff]
        %v1265 = vld [vmem:[#allocation2 + $0x60] sm:$0xff]
        %v1266 = vld [vmem:[#allocation2 + $0x68] sm:$0xff]
        %v1267 = vld [vmem:[#allocation2 + $0x70] sm:$0xff]
        %v1268 = vld [vmem:[#allocation2 + $0x78] sm:$0xff]
        %v1269 = vld [vmem:[#allocation3] sm:$0xff]
        %v1270 = vld [vmem:[#allocation3 + $0x8] sm:$0xff]
        %v1271 = vld [vmem:[#allocation3 + $0x10] sm:$0xff]
        %v1272 = vld [vmem:[#allocation3 + $0x18] sm:$0xff]
        %v1273 = vld [vmem:[#allocation3 + $0x20] sm:$0xff]
        %v1274 = vld [vmem:[#allocation3 + $0x28] sm:$0xff]
        %v1275 = vld [vmem:[#allocation3 + $0x30] sm:$0xff]
        %v1276 = vld [vmem:[#allocation3 + $0x38] sm:$0xff]
        %v1277 = vld [vmem:[#allocation3 + $0x40] sm:$0xff]
        %v1278 = vld [vmem:[#allocation3 + $0x48] sm:$0xff]
        %v1279 = vld [vmem:[#allocation3 + $0x50] sm:$0xff]
        %v1280 = vld [vmem:[#allocation3 + $0x58] sm:$0xff]
        %v1281 = vld [vmem:[#allocation3 + $0x60] sm:$0xff]
        %v1282 = vld [vmem:[#allocation3 + $0x68] sm:$0xff]
        %v1283 = vld [vmem:[#allocation3 + $0x70] sm:$0xff]
        %v1284 = vld [vmem:[#allocation3 + $0x78] sm:$0xff]
        %v1285 = vld [vmem:[%s1] sm:$0xff]
        %v1286 = vld [vmem:[%s1 + $0x8] sm:$0xff]
        %v1287 = vld [vmem:[%s1 + $0x10] sm:$0xff]
        %v1288 = vld [vmem:[%s1 + $0x18] sm:$0xff]
        %v1289 = vld [vmem:[%s1 + $0x20] sm:$0xff]
        %v1290 = vld [vmem:[%s1 + $0x28] sm:$0xff]
        %v1291 = vld [vmem:[%s1 + $0x30] sm:$0xff]
        %v1292 = vld [vmem:[%s1 + $0x38] sm:$0xff]
        %v1293 = vld [vmem:[%s1 + $0x40] sm:$0xff]
        %v1294 = vld [vmem:[%s1 + $0x48] sm:$0xff]
        %v1295 = vld [vmem:[%s1 + $0x50] sm:$0xff]
        %v1296 = vld [vmem:[%s1 + $0x58] sm:$0xff]
        %v1297 = vld [vmem:[%s1 + $0x60] sm:$0xff]
        %v1298 = vld [vmem:[%s1 + $0x68] sm:$0xff]
        %v1299 = vld [vmem:[%s1 + $0x70] sm:$0xff]
        %v1300 = vld [vmem:[%s1 + $0x78] sm:$0xff]
        %1302 = vset.pattern.permute.xlu0 0
        %1303 = vperm.xlu0 %1302, %v1269
        %v1304 = vpop.permute.xlu0 %1303
        %1307 = vset.pattern.permute.xlu0 0
        %1308 = vperm.xlu0 %1307, %v1270
        %v1309 = vpop.permute.xlu0 %1308
        %1312 = vset.pattern.permute.xlu0 0
        %1313 = vperm.xlu0 %1312, %v1271
        %v1314 = vpop.permute.xlu0 %1313
        %1317 = vset.pattern.permute.xlu0 0
        %1318 = vperm.xlu0 %1317, %v1272
        %v1319 = vpop.permute.xlu0 %1318
        %1322 = vset.pattern.permute.xlu0 0
        %1323 = vperm.xlu0 %1322, %v1273
        %v1324 = vpop.permute.xlu0 %1323
        %1327 = vset.pattern.permute.xlu0 0
        %1328 = vperm.xlu0 %1327, %v1274
        %v1329 = vpop.permute.xlu0 %1328
        %1332 = vset.pattern.permute.xlu0 0
        %1333 = vperm.xlu0 %1332, %v1275
        %v1334 = vpop.permute.xlu0 %1333
        %1337 = vset.pattern.permute.xlu0 0
        %1338 = vperm.xlu0 %1337, %v1276
        %v1339 = vpop.permute.xlu0 %1338
        %1342 = vset.pattern.permute.xlu0 0
        %1343 = vperm.xlu0 %1342, %v1277
        %v1344 = vpop.permute.xlu0 %1343
        %1347 = vset.pattern.permute.xlu0 0
        %1348 = vperm.xlu0 %1347, %v1278
        %v1349 = vpop.permute.xlu0 %1348
        %1352 = vset.pattern.permute.xlu0 0
        %1353 = vperm.xlu0 %1352, %v1279
        %v1354 = vpop.permute.xlu0 %1353
        %1357 = vset.pattern.permute.xlu0 0
        %1358 = vperm.xlu0 %1357, %v1280
        %v1359 = vpop.permute.xlu0 %1358
        %1362 = vset.pattern.permute.xlu0 0
        %1363 = vperm.xlu0 %1362, %v1281
        %v1364 = vpop.permute.xlu0 %1363
        %1367 = vset.pattern.permute.xlu0 0
        %1368 = vperm.xlu0 %1367, %v1282
        %v1369 = vpop.permute.xlu0 %1368
        %1372 = vset.pattern.permute.xlu0 0
        %1373 = vperm.xlu0 %1372, %v1283
        %v1374 = vpop.permute.xlu0 %1373
        %1377 = vset.pattern.permute.xlu0 0
        %1378 = vperm.xlu0 %1377, %v1284
        %v1379 = vpop.permute.xlu0 %1378
        %v1381 = vmul.f32 %v1304, %v1285
        %v1382 = vmul.f32 %v1309, %v1286
        %v1383 = vmul.f32 %v1314, %v1287
        %v1384 = vmul.f32 %v1319, %v1288
        %v1385 = vmul.f32 %v1324, %v1289
        %v1386 = vmul.f32 %v1329, %v1290
        %v1387 = vmul.f32 %v1334, %v1291
        %v1388 = vmul.f32 %v1339, %v1292
        %v1389 = vmul.f32 %v1344, %v1293
        %v1390 = vmul.f32 %v1349, %v1294
        %v1391 = vmul.f32 %v1354, %v1295
        %v1392 = vmul.f32 %v1359, %v1296
        %v1393 = vmul.f32 %v1364, %v1297
        %v1394 = vmul.f32 %v1369, %v1298
        %v1395 = vmul.f32 %v1374, %v1299
        %v1396 = vmul.f32 %v1379, %v1300
        %v1397 = vsub.f32 %v1253, %v1381
        %v1398 = vsub.f32 %v1254, %v1382
        %v1399 = vsub.f32 %v1255, %v1383
        %v1400 = vsub.f32 %v1256, %v1384
        %v1401 = vsub.f32 %v1257, %v1385
        %v1402 = vsub.f32 %v1258, %v1386
        %v1403 = vsub.f32 %v1259, %v1387
        %v1404 = vsub.f32 %v1260, %v1388
        %v1405 = vsub.f32 %v1261, %v1389
        %v1406 = vsub.f32 %v1262, %v1390
        %v1407 = vsub.f32 %v1263, %v1391
        %v1408 = vsub.f32 %v1264, %v1392
        %v1409 = vsub.f32 %v1265, %v1393
        %v1410 = vsub.f32 %v1266, %v1394
        %v1411 = vsub.f32 %v1267, %v1395
        %v1412 = vsub.f32 %v1268, %v1396
        %1413 = vst.msk [vmem:[%s247] sm:$0xff] %vm324, %v1397
        %1414 = vst.msk [vmem:[%s247 + $0x8] sm:$0xff] %vm324, %v1398
        %1415 = vst.msk [vmem:[%s247 + $0x10] sm:$0xff] %vm324, %v1399
        %1416 = vst.msk [vmem:[%s247 + $0x18] sm:$0xff] %vm324, %v1400
        %1417 = vst.msk [vmem:[%s247 + $0x20] sm:$0xff] %vm324, %v1401
        %1418 = vst.msk [vmem:[%s247 + $0x28] sm:$0xff] %vm324, %v1402
        %1419 = vst.msk [vmem:[%s247 + $0x30] sm:$0xff] %vm324, %v1403
        %1420 = vst.msk [vmem:[%s247 + $0x38] sm:$0xff] %vm324, %v1404
        %1421 = vst.msk [vmem:[%s247 + $0x40] sm:$0xff] %vm324, %v1405
        %1422 = vst.msk [vmem:[%s247 + $0x48] sm:$0xff] %vm324, %v1406
        %1423 = vst.msk [vmem:[%s247 + $0x50] sm:$0xff] %vm324, %v1407
        %1424 = vst.msk [vmem:[%s247 + $0x58] sm:$0xff] %vm324, %v1408
        %1425 = vst.msk [vmem:[%s247 + $0x60] sm:$0xff] %vm324, %v1409
        %1426 = vst.msk [vmem:[%s247 + $0x68] sm:$0xff] %vm324, %v1410
        %1427 = vst.msk [vmem:[%s247 + $0x70] sm:$0xff] %vm324, %v1411
        %1428 = vst.msk [vmem:[%s247 + $0x78] sm:$0xff] %vm324, %v1412
      $region48: #{vlad_forward.1} parent=39 // pred_fallthru
        _
      %p1429 = scmp.lt.s32.totalorder %s20, 1
      %s1430 = scalar_select %p1429, %s20, 1
      %s1431 = smul.addr %s1430, 16
      %s1432 = smul.addr %s1431, 8
      %s1433 = scalar_lea.vmem %s5, %s1432
      // Predicated region
      $region49: #{vlad_forward.1} parent=39 // pred_check
        %p1434 = pneg %p158
      $region50: #{vlad_forward.1} parent=39 // pred_check_branch
        %1436 = sbr.rel (%p1434) target = $region52
      $region51: #{vlad_forward.1} parent=39 // pred_region
        _
      $region52: #{vlad_forward.1} parent=39 // pred_fallthru
        _
    $region40: #{vlad_forward.1} parent=5 // pred_fallthru
      _
    %p1437 = scmp.le.s32.totalorder 2, %s11
    // Predicated region
    $region53: #{vlad_forward.1} parent=5 // pred_check
      %p1438 = pneg %p1437
    $region54: #{vlad_forward.1} parent=5 // pred_check_branch
      %1440 = sbr.rel (%p1438) target = $region56
    $region55: #{vlad_forward.1} parent=5 // pred_region
      %s1441 = ssub.s32 %s11, 2
      // Predicated region
      $region57: #{vlad_forward.1} parent=55 // pred_check
        %p1442 = pneg %p164
      $region58: #{vlad_forward.1} parent=55 // pred_check_branch
        %1444 = sbr.rel (%p1442) target = $region60
      $region59: #{vlad_forward.1} parent=55 // pred_region
        %p1445 = scmp.lt.s32.totalorder %s22, 1
        %s1446 = scalar_select %p1445, %s22, 1
        %s1447 = smul.addr %s1446, 16
        %s1448 = smul.addr %s1447, 8
        %s1449 = scalar_lea.vmem %s5, %s1448
      $region60: #{vlad_forward.1} parent=55 // pred_fallthru
        _
    $region56: #{vlad_forward.1} parent=5 // pred_fallthru
      _
  $region6: #{vlad_forward.1} parent=0 // loop_footer
    %s15 = sadd.s32 1, %s11
  $region7: #{vlad_forward.1} parent=0 // loop_footer_branch
    %10 = sbr.rel target = $region3
  $region8: #{vlad_forward.1} parent=0 // loop_exit
    _

</llo_original>
